<compile_context>
chip_gen: v7x
topology: tpu7x:2x2x1
jax: 0.10.0
libtpu: 0.0.40
codegen_flags: <defaults>
</compile_context>

<pallas_src>
import functools

import jax
import jax.numpy as jnp
from jax.experimental import pallas as pl
from jax.experimental.pallas import tpu as pltpu


def _round_up(n, m):
    return ((n + m - 1) // m) * m


def gru_fused_kernel(gi_ref, whh_ref, bhn_ref, wlin_ref, blin_ref, y_ref, h_scratch):
    """One chunk of Tc timesteps of the GRU recurrence with the output Linear fused in.

    gi_ref:    (Tc, B, 3*Hp) precomputed x @ W_ih^T (+ folded r/z biases); gate blocks
               r|z|n each Hp wide (128-lane aligned -> whole-vreg gate splits).
    whh_ref:   (Hp, 3*Hp)    fused hidden weight [W_hr^T | W_hz^T | W_hn^T].
    bhn_ref:   (1, 3*Hp)     [0 | 0 | b_hn]  (b_hn must stay inside r * (...)).
    wlin_ref:  (Hp, Op)      output Linear weight^T (zero-padded).
    blin_ref:  (1, Op)       output Linear bias (zero-padded).
    y_ref:     (Tc, B, Op)   projected output for this chunk (lane-dense slab).
    h_scratch: (B, Hp)       hidden state carried across sequential grid steps.
    """
    @pl.when(pl.program_id(0) == 0)
    def _():
        h_scratch[...] = jnp.zeros_like(h_scratch)

    # Hoist constant weight/bias loads out of the unrolled inner loop.
    whh = whh_ref[...]
    bhn = bhn_ref[...]
    wlin = wlin_ref[...]
    blin = blin_ref[...]

    t_chunk = gi_ref.shape[0]
    hp = whh.shape[0]

    def step(i, h):
        gi = gi_ref[i]                                               # (B, 3*Hp)
        # Single fused MXU push per step: one (B,Hp)x(Hp,3Hp) matmul for all 3 gates
        # instead of three small drains on the serial critical path.
        gh = jnp.dot(h, whh, preferred_element_type=jnp.float32) + bhn
        r = jax.nn.sigmoid(gi[:, 0:hp] + gh[:, 0:hp])
        z = jax.nn.sigmoid(gi[:, hp:2 * hp] + gh[:, hp:2 * hp])
        n = jnp.tanh(gi[:, 2 * hp:3 * hp] + r * gh[:, 2 * hp:3 * hp])
        h_new = (1.0 - z) * n + z * h
        # Fused output projection: no serial data dependency (fills MXU slack); the
        # chunk's output block is written back to HBM once as a lane-dense slab, and
        # the (T,B,H) hidden sequence never touches HBM.
        y_ref[i] = jnp.dot(h_new, wlin, preferred_element_type=jnp.float32) + blin
        return h_new

    unroll = True if t_chunk <= 8 else 8   # cap unroll to avoid vreg spills at large Tc
    h_last = jax.lax.fori_loop(0, t_chunk, step, h_scratch[...], unroll=unroll)
    h_scratch[...] = h_last


@functools.partial(jax.jit, static_argnames=("t_chunk",))
def gru_forward(x, params, t_chunk=None):
    """x: (B, T, C_in) float32 -> (B, T, out_channels) float32."""
    B, T, Cin = x.shape
    H = params["w_hr_t"].shape[0]
    out_ch = params["w_lin_t"].shape[1]
    Hp = _round_up(H, 128)       # lane-dense gate blocks (whole-vreg selects)
    Op = _round_up(out_ch, 128)  # lane-dense output stores

    if t_chunk is None:
        t_chunk = T              # one grid step at toy sizes -> no per-step overhead
    t_chunk = min(t_chunk, T)
    assert T % t_chunk == 0, "T must be divisible by t_chunk"
    n_chunks = T // t_chunk

    def padc(a, cols):                       # zero-pad columns (last dim)
        return jnp.pad(a, ((0, 0), (0, cols - a.shape[1])))

    def padrc(a, rows, cols):                # zero-pad rows and columns
        return jnp.pad(a, ((0, rows - a.shape[0]), (0, cols - a.shape[1])))

    # ---- Pack / zero-pad parameters into the fused, lane-aligned kernel layout ----
    w_ih_t = params["w_ih_t"]                # (Cin, 3H), gate order r|z|n
    b_ih = params["b_ih"]                    # (1, 3H)
    w_ih_cat = jnp.concatenate(
        [padc(w_ih_t[:, g * H:(g + 1) * H], Hp) for g in range(3)], axis=1)  # (Cin, 3Hp)
    b_gi = jnp.concatenate(
        [padc(b_ih[:, 0:H] + params["b_hr"], Hp),          # fold b_hr (outside sigmoid)
         padc(b_ih[:, H:2 * H] + params["b_hz"], Hp),      # fold b_hz
         padc(b_ih[:, 2 * H:3 * H], Hp)], axis=1)          # b_hn stays in-kernel
    w_hh_cat = jnp.concatenate(
        [padrc(params["w_hr_t"], Hp, Hp),
         padrc(params["w_hz_t"], Hp, Hp),
         padrc(params["w_hn_t"], Hp, Hp)], axis=1)         # (Hp, 3Hp)
    b_hn_cat = jnp.concatenate(
        [jnp.zeros((1, 2 * Hp), jnp.float32), padc(params["b_hn"], Hp)], axis=1)
    w_lin_p = padrc(params["w_lin_t"], Hp, Op)             # (Hp, Op)
    b_lin_p = padc(params["b_lin"], Op)                    # (1, Op)

    # ---- Phase 1 (parallel, hoisted): input-gate matmul for all timesteps at once ----
    x_tbc = jnp.transpose(x, (1, 0, 2))                    # (T, B, Cin)
    gi = x_tbc @ w_ih_cat + b_gi                           # (T, B, 3Hp), one big matmul

    # ---- Phase 2 (serial Pallas recurrence + fused output projection) ----
    y_tbo = pl.pallas_call(
        gru_fused_kernel,
        out_shape=jax.ShapeDtypeStruct((T, B, Op), jnp.float32),
        grid_spec=pltpu.PrefetchScalarGridSpec(
            num_scalar_prefetch=0,
            grid=(n_chunks,),
            in_specs=[
                pl.BlockSpec((t_chunk, B, 3 * Hp), lambda t: (t, 0, 0)),  # gi (1 stream)
                pl.BlockSpec((Hp, 3 * Hp), lambda t: (0, 0)),             # W_hh fused
                pl.BlockSpec((1, 3 * Hp), lambda t: (0, 0)),              # [0|0|b_hn]
                pl.BlockSpec((Hp, Op), lambda t: (0, 0)),                 # W_lin^T
                pl.BlockSpec((1, Op), lambda t: (0, 0)),                  # b_lin
            ],
            out_specs=pl.BlockSpec((t_chunk, B, Op), lambda t: (t, 0, 0)),
            scratch_shapes=[pltpu.VMEM((B, Hp), jnp.float32)],
        ),
        compiler_params=pltpu.CompilerParams(
            dimension_semantics=("arbitrary",)),   # recurrence over time: sequential
    )(gi, w_hh_cat, b_hn_cat, w_lin_p, b_lin_p)

    return jnp.transpose(y_tbo, (1, 0, 2))[:, :, :out_ch]   # (B, T, out)


def gru_reference(x, params):
    """Pure-JAX reference identical to PyTorch nn.GRU (1 layer) + nn.Linear."""
    w_ih_t, b_ih = params["w_ih_t"], params["b_ih"]
    w_hr_t, w_hz_t, w_hn_t = params["w_hr_t"], params["w_hz_t"], params["w_hn_t"]
    b_hr, b_hz, b_hn = params["b_hr"], params["b_hz"], params["b_hn"]
    w_lin_t, b_lin = params["w_lin_t"], params["b_lin"]
    B, T, _ = x.shape
    H = w_hr_t.shape[0]

    def step(h, x_t):
        gi = x_t @ w_ih_t + b_ih
        r = jax.nn.sigmoid(gi[:, :H] + h @ w_hr_t + b_hr)
        z = jax.nn.sigmoid(gi[:, H:2 * H] + h @ w_hz_t + b_hz)
        n = jnp.tanh(gi[:, 2 * H:] + r * (h @ w_hn_t + b_hn))
        h_new = (1.0 - z) * n + z * h
        return h_new, h_new

    h0 = jnp.zeros((B, H), jnp.float32)
    _, hs = jax.lax.scan(step, h0, jnp.transpose(x, (1, 0, 2)))   # (T, B, H)
    hidden = jnp.transpose(hs, (1, 0, 2))                          # (B, T, H)
    return hidden @ w_lin_t + b_lin


def init_params(key, in_channels, hidden_channels, out_channels):
    """Deterministic init matching PyTorch default shapes (num_layers=1, bias=True),
    stored in the per-gate / transposed layout the wrapper consumes."""
    H = hidden_channels
    k_gru = 1.0 / jnp.sqrt(jnp.float32(H))
    k_lin = 1.0 / jnp.sqrt(jnp.float32(H))   # Linear in_features = num_layers * H = H
    keys = jax.random.split(key, 6)
    # PyTorch stores weight_ih_l0 as (3H, in), weight_hh_l0 as (3H, H); gate order r,z,n.
    w_ih = jax.random.uniform(keys[0], (3 * H, in_channels), jnp.float32, -k_gru, k_gru)
    w_hh = jax.random.uniform(keys[1], (3 * H, H), jnp.float32, -k_gru, k_gru)
    b_ih = jax.random.uniform(keys[2], (3 * H,), jnp.float32, -k_gru, k_gru)
    b_hh = jax.random.uniform(keys[3], (3 * H,), jnp.float32, -k_gru, k_gru)
    w_lin = jax.random.uniform(keys[4], (out_channels, H), jnp.float32, -k_lin, k_lin)
    b_lin = jax.random.uniform(keys[5], (out_channels,), jnp.float32, -k_lin, k_lin)
    return {
        "w_ih_t": jnp.transpose(w_ih),                 # (in, 3H)
        "b_ih": b_ih.reshape(1, 3 * H),
        "w_hr_t": jnp.transpose(w_hh[0:H, :]),         # (H, H)
        "w_hz_t": jnp.transpose(w_hh[H:2 * H, :]),     # (H, H)
        "w_hn_t": jnp.transpose(w_hh[2 * H:, :]),      # (H, H)
        "b_hr": b_hh[0:H].reshape(1, H),
        "b_hz": b_hh[H:2 * H].reshape(1, H),
        "b_hn": b_hh[2 * H:].reshape(1, H),
        "w_lin_t": jnp.transpose(w_lin),               # (H, out)
        "b_lin": b_lin.reshape(1, out_channels),
    }


if __name__ == "__main__":
    # Module config: num_layers=1 (so Linear in_features == hidden_channels,
    # exactly as the PyTorch forward requires), bias=True, dropout=0.
    B, T = 2, 8
    in_channels, hidden_channels, out_channels = 4, 32, 16

    key = jax.random.PRNGKey(0)
    k_x, k_p = jax.random.split(key)
    x = jax.random.normal(k_x, (B, T, in_channels), jnp.float32)
    params = init_params(k_p, in_channels, hidden_channels, out_channels)

    y = jax.block_until_ready(gru_forward(x, params))        # t_chunk defaults to T
    y_ref = jax.block_until_ready(gru_reference(x, params))

    assert y.shape == (B, T, out_channels)
    assert jnp.allclose(y, y_ref, atol=1e-5, rtol=1e-5), "mismatch vs reference"

    print("KERNEL_OK")
</pallas_src>

<mosaic_0001>
module attributes {stable_mosaic.version = 11 : i64} {
  func.func @gru_fused_kernel(%arg0: i32, %arg1: memref<8x2x384xf32, #tpu.memory_space<vmem>>, %arg2: memref<128x384xf32, #tpu.memory_space<vmem>>, %arg3: memref<1x384xf32, #tpu.memory_space<vmem>>, %arg4: memref<128x128xf32, #tpu.memory_space<vmem>>, %arg5: memref<1x128xf32, #tpu.memory_space<vmem>>, %arg6: memref<8x2x128xf32, #tpu.memory_space<vmem>>, %arg7: memref<2x128xf32, #tpu.memory_space<vmem>>) attributes {dimension_semantics = [#tpu.dimension_semantics<arbitrary>], iteration_bounds = array<i64: 1>, scalar_prefetch = 0 : i64, scratch_operands = 1 : i64, tpu.core_type = #tpu.core_type<tc>, window_params = [{transform_indices = @transform_0, window_bounds = array<i64: 8, 2, 384>}, {pipeline_mode = #tpu.pipeline_mode<synchronous>, transform_indices = @transform_1, window_bounds = array<i64: 128, 384>}, {pipeline_mode = #tpu.pipeline_mode<synchronous>, transform_indices = @transform_2, window_bounds = array<i64: 1, 384>}, {pipeline_mode = #tpu.pipeline_mode<synchronous>, transform_indices = @transform_3, window_bounds = array<i64: 128, 128>}, {pipeline_mode = #tpu.pipeline_mode<synchronous>, transform_indices = @transform_4, window_bounds = array<i64: 1, 128>}, {transform_indices = @transform_5, window_bounds = array<i64: 8, 2, 128>}]} {
    %c0_i32 = arith.constant 0 : i32
    %0 = arith.cmpi eq, %arg0, %c0_i32 : i32
    %1 = arith.extui %0 : i1 to i32
    %c0_i32_0 = arith.constant 0 : i32
    %2 = arith.cmpi ne, %1, %c0_i32_0 : i32
    scf.if %2 {
      %cst_84 = arith.constant 0.000000e+00 : f32
      %321 = vector.broadcast %cst_84 : f32 to vector<2x128xf32>
      %c0_85 = arith.constant 0 : index
      %c0_86 = arith.constant 0 : index
      %322 = vector.load %arg7[%c0_85, %c0_86] : memref<2x128xf32, #tpu.memory_space<vmem>>, vector<2x128xf32>
      tpu.vector_store %arg7[%c0_85, %c0_86], %321 {strides = array<i32>} : memref<2x128xf32, #tpu.memory_space<vmem>>, vector<2x128xf32>,
    } else {
    }
    %c0 = arith.constant 0 : index
    %c0_1 = arith.constant 0 : index
    %3 = vector.load %arg2[%c0, %c0_1] : memref<128x384xf32, #tpu.memory_space<vmem>>, vector<128x384xf32>
    %c0_2 = arith.constant 0 : index
    %c0_3 = arith.constant 0 : index
    %4 = vector.load %arg3[%c0_2, %c0_3] : memref<1x384xf32, #tpu.memory_space<vmem>>, vector<1x384xf32>
    %c0_4 = arith.constant 0 : index
    %c0_5 = arith.constant 0 : index
    %5 = vector.load %arg4[%c0_4, %c0_5] : memref<128x128xf32, #tpu.memory_space<vmem>>, vector<128x128xf32>
    %c0_6 = arith.constant 0 : index
    %c0_7 = arith.constant 0 : index
    %6 = vector.load %arg5[%c0_6, %c0_7] : memref<1x128xf32, #tpu.memory_space<vmem>>, vector<1x128xf32>
    %c0_8 = arith.constant 0 : index
    %c0_9 = arith.constant 0 : index
    %7 = vector.load %arg7[%c0_8, %c0_9] : memref<2x128xf32, #tpu.memory_space<vmem>>, vector<2x128xf32>
    %c0_i32_10 = arith.constant 0 : i32
    %8 = arith.index_cast %c0_i32_10 : i32 to index
    %c0_11 = arith.constant 0 : index
    %c0_12 = arith.constant 0 : index
    %9 = vector.load %arg1[%8, %c0_11, %c0_12] : memref<8x2x384xf32, #tpu.memory_space<vmem>>, vector<1x2x384xf32>
    %10 = vector.shape_cast %9 : vector<1x2x384xf32> to vector<2x384xf32>
    %cst = arith.constant dense<0.000000e+00> : vector<2x384xf32>
    %11 = tpu.matmul %7, %3, %cst {dimension_numbers = #tpu.dot_dimension_numbers<[1], [0], [0], [1], [0, 0, 1, 1], [], []>} : vector<2x128xf32>, vector<128x384xf32>, vector<2x384xf32> -> vector<2x384xf32>
    %12 = vector.broadcast %4 : vector<1x384xf32> to vector<2x384xf32>
    %13 = arith.addf %11, %12 : vector<2x384xf32>
    %14 = vector.extract_strided_slice %10 {offsets = [0, 0], sizes = [2, 128], strides = [1, 1]} : vector<2x384xf32> to vector<2x128xf32>
    %15 = vector.extract_strided_slice %13 {offsets = [0, 0], sizes = [2, 128], strides = [1, 1]} : vector<2x384xf32> to vector<2x128xf32>
    %16 = arith.addf %14, %15 : vector<2x128xf32>
    %17 = arith.negf %16 : vector<2x128xf32>
    %18 = math.exp %17 : vector<2x128xf32>
    %cst_13 = arith.constant 1.000000e+00 : f32
    %19 = vector.broadcast %cst_13 : f32 to vector<2x128xf32>
    %20 = arith.addf %19, %18 : vector<2x128xf32>
    %21 = arith.divf %19, %20 : vector<2x128xf32>
    %22 = vector.extract_strided_slice %10 {offsets = [0, 128], sizes = [2, 128], strides = [1, 1]} : vector<2x384xf32> to vector<2x128xf32>
    %23 = vector.extract_strided_slice %13 {offsets = [0, 128], sizes = [2, 128], strides = [1, 1]} : vector<2x384xf32> to vector<2x128xf32>
    %24 = arith.addf %22, %23 : vector<2x128xf32>
    %25 = arith.negf %24 : vector<2x128xf32>
    %26 = math.exp %25 : vector<2x128xf32>
    %cst_14 = arith.constant 1.000000e+00 : f32
    %27 = vector.broadcast %cst_14 : f32 to vector<2x128xf32>
    %28 = arith.addf %27, %26 : vector<2x128xf32>
    %29 = arith.divf %27, %28 : vector<2x128xf32>
    %30 = vector.extract_strided_slice %10 {offsets = [0, 256], sizes = [2, 128], strides = [1, 1]} : vector<2x384xf32> to vector<2x128xf32>
    %31 = vector.extract_strided_slice %13 {offsets = [0, 256], sizes = [2, 128], strides = [1, 1]} : vector<2x384xf32> to vector<2x128xf32>
    %32 = arith.mulf %21, %31 : vector<2x128xf32>
    %33 = arith.addf %30, %32 : vector<2x128xf32>
    %34 = math.tanh %33 : vector<2x128xf32>
    %cst_15 = arith.constant 1.000000e+00 : f32
    %35 = vector.broadcast %cst_15 : f32 to vector<2x128xf32>
    %36 = arith.subf %35, %29 : vector<2x128xf32>
    %37 = arith.mulf %36, %34 : vector<2x128xf32>
    %38 = arith.mulf %29, %7 : vector<2x128xf32>
    %39 = arith.addf %37, %38 : vector<2x128xf32>
    %cst_16 = arith.constant dense<0.000000e+00> : vector<2x128xf32>
    %40 = tpu.matmul %39, %5, %cst_16 {dimension_numbers = #tpu.dot_dimension_numbers<[1], [0], [0], [1], [0, 0, 1, 1], [], []>} : vector<2x128xf32>, vector<128x128xf32>, vector<2x128xf32> -> vector<2x128xf32>
    %41 = vector.broadcast %6 : vector<1x128xf32> to vector<2x128xf32>
    %42 = arith.addf %40, %41 : vector<2x128xf32>
    %43 = arith.index_cast %c0_i32_10 : i32 to index
    %c0_17 = arith.constant 0 : index
    %c0_18 = arith.constant 0 : index
    %44 = vector.load %arg6[%43, %c0_17, %c0_18] : memref<8x2x128xf32, #tpu.memory_space<vmem>>, vector<1x2x128xf32>
    %45 = vector.shape_cast %44 : vector<1x2x128xf32> to vector<2x128xf32>
    %46 = vector.shape_cast %42 : vector<2x128xf32> to vector<1x2x128xf32>
    tpu.vector_store %arg6[%43, %c0_17, %c0_18], %46 {strides = array<i32>} : memref<8x2x128xf32, #tpu.memory_space<vmem>>, vector<1x2x128xf32>,
    %c1_i32 = arith.constant 1 : i32
    %47 = arith.index_cast %c1_i32 : i32 to index
    %c0_19 = arith.constant 0 : index
    %c0_20 = arith.constant 0 : index
    %48 = vector.load %arg1[%47, %c0_19, %c0_20] : memref<8x2x384xf32, #tpu.memory_space<vmem>>, vector<1x2x384xf32>
    %49 = vector.shape_cast %48 : vector<1x2x384xf32> to vector<2x384xf32>
    %cst_21 = arith.constant dense<0.000000e+00> : vector<2x384xf32>
    %50 = tpu.matmul %39, %3, %cst_21 {dimension_numbers = #tpu.dot_dimension_numbers<[1], [0], [0], [1], [0, 0, 1, 1], [], []>} : vector<2x128xf32>, vector<128x384xf32>, vector<2x384xf32> -> vector<2x384xf32>
    %51 = vector.broadcast %4 : vector<1x384xf32> to vector<2x384xf32>
    %52 = arith.addf %50, %51 : vector<2x384xf32>
    %53 = vector.extract_strided_slice %49 {offsets = [0, 0], sizes = [2, 128], strides = [1, 1]} : vector<2x384xf32> to vector<2x128xf32>
    %54 = vector.extract_strided_slice %52 {offsets = [0, 0], sizes = [2, 128], strides = [1, 1]} : vector<2x384xf32> to vector<2x128xf32>
    %55 = arith.addf %53, %54 : vector<2x128xf32>
    %56 = arith.negf %55 : vector<2x128xf32>
    %57 = math.exp %56 : vector<2x128xf32>
    %cst_22 = arith.constant 1.000000e+00 : f32
    %58 = vector.broadcast %cst_22 : f32 to vector<2x128xf32>
    %59 = arith.addf %58, %57 : vector<2x128xf32>
    %60 = arith.divf %58, %59 : vector<2x128xf32>
    %61 = vector.extract_strided_slice %49 {offsets = [0, 128], sizes = [2, 128], strides = [1, 1]} : vector<2x384xf32> to vector<2x128xf32>
    %62 = vector.extract_strided_slice %52 {offsets = [0, 128], sizes = [2, 128], strides = [1, 1]} : vector<2x384xf32> to vector<2x128xf32>
    %63 = arith.addf %61, %62 : vector<2x128xf32>
    %64 = arith.negf %63 : vector<2x128xf32>
    %65 = math.exp %64 : vector<2x128xf32>
    %cst_23 = arith.constant 1.000000e+00 : f32
    %66 = vector.broadcast %cst_23 : f32 to vector<2x128xf32>
    %67 = arith.addf %66, %65 : vector<2x128xf32>
    %68 = arith.divf %66, %67 : vector<2x128xf32>
    %69 = vector.extract_strided_slice %49 {offsets = [0, 256], sizes = [2, 128], strides = [1, 1]} : vector<2x384xf32> to vector<2x128xf32>
    %70 = vector.extract_strided_slice %52 {offsets = [0, 256], sizes = [2, 128], strides = [1, 1]} : vector<2x384xf32> to vector<2x128xf32>
    %71 = arith.mulf %60, %70 : vector<2x128xf32>
    %72 = arith.addf %69, %71 : vector<2x128xf32>
    %73 = math.tanh %72 : vector<2x128xf32>
    %cst_24 = arith.constant 1.000000e+00 : f32
    %74 = vector.broadcast %cst_24 : f32 to vector<2x128xf32>
    %75 = arith.subf %74, %68 : vector<2x128xf32>
    %76 = arith.mulf %75, %73 : vector<2x128xf32>
    %77 = arith.mulf %68, %39 : vector<2x128xf32>
    %78 = arith.addf %76, %77 : vector<2x128xf32>
    %cst_25 = arith.constant dense<0.000000e+00> : vector<2x128xf32>
    %79 = tpu.matmul %78, %5, %cst_25 {dimension_numbers = #tpu.dot_dimension_numbers<[1], [0], [0], [1], [0, 0, 1, 1], [], []>} : vector<2x128xf32>, vector<128x128xf32>, vector<2x128xf32> -> vector<2x128xf32>
    %80 = vector.broadcast %6 : vector<1x128xf32> to vector<2x128xf32>
    %81 = arith.addf %79, %80 : vector<2x128xf32>
    %82 = arith.index_cast %c1_i32 : i32 to index
    %c0_26 = arith.constant 0 : index
    %c0_27 = arith.constant 0 : index
    %83 = vector.load %arg6[%82, %c0_26, %c0_27] : memref<8x2x128xf32, #tpu.memory_space<vmem>>, vector<1x2x128xf32>
    %84 = vector.shape_cast %83 : vector<1x2x128xf32> to vector<2x128xf32>
    %85 = vector.shape_cast %81 : vector<2x128xf32> to vector<1x2x128xf32>
    tpu.vector_store %arg6[%82, %c0_26, %c0_27], %85 {strides = array<i32>} : memref<8x2x128xf32, #tpu.memory_space<vmem>>, vector<1x2x128xf32>,
    %c2_i32 = arith.constant 2 : i32
    %86 = arith.index_cast %c2_i32 : i32 to index
    %c0_28 = arith.constant 0 : index
    %c0_29 = arith.constant 0 : index
    %87 = vector.load %arg1[%86, %c0_28, %c0_29] : memref<8x2x384xf32, #tpu.memory_space<vmem>>, vector<1x2x384xf32>
    %88 = vector.shape_cast %87 : vector<1x2x384xf32> to vector<2x384xf32>
    %cst_30 = arith.constant dense<0.000000e+00> : vector<2x384xf32>
    %89 = tpu.matmul %78, %3, %cst_30 {dimension_numbers = #tpu.dot_dimension_numbers<[1], [0], [0], [1], [0, 0, 1, 1], [], []>} : vector<2x128xf32>, vector<128x384xf32>, vector<2x384xf32> -> vector<2x384xf32>
    %90 = vector.broadcast %4 : vector<1x384xf32> to vector<2x384xf32>
    %91 = arith.addf %89, %90 : vector<2x384xf32>
    %92 = vector.extract_strided_slice %88 {offsets = [0, 0], sizes = [2, 128], strides = [1, 1]} : vector<2x384xf32> to vector<2x128xf32>
    %93 = vector.extract_strided_slice %91 {offsets = [0, 0], sizes = [2, 128], strides = [1, 1]} : vector<2x384xf32> to vector<2x128xf32>
    %94 = arith.addf %92, %93 : vector<2x128xf32>
    %95 = arith.negf %94 : vector<2x128xf32>
    %96 = math.exp %95 : vector<2x128xf32>
    %cst_31 = arith.constant 1.000000e+00 : f32
    %97 = vector.broadcast %cst_31 : f32 to vector<2x128xf32>
    %98 = arith.addf %97, %96 : vector<2x128xf32>
    %99 = arith.divf %97, %98 : vector<2x128xf32>
    %100 = vector.extract_strided_slice %88 {offsets = [0, 128], sizes = [2, 128], strides = [1, 1]} : vector<2x384xf32> to vector<2x128xf32>
    %101 = vector.extract_strided_slice %91 {offsets = [0, 128], sizes = [2, 128], strides = [1, 1]} : vector<2x384xf32> to vector<2x128xf32>
    %102 = arith.addf %100, %101 : vector<2x128xf32>
    %103 = arith.negf %102 : vector<2x128xf32>
    %104 = math.exp %103 : vector<2x128xf32>
    %cst_32 = arith.constant 1.000000e+00 : f32
    %105 = vector.broadcast %cst_32 : f32 to vector<2x128xf32>
    %106 = arith.addf %105, %104 : vector<2x128xf32>
    %107 = arith.divf %105, %106 : vector<2x128xf32>
    %108 = vector.extract_strided_slice %88 {offsets = [0, 256], sizes = [2, 128], strides = [1, 1]} : vector<2x384xf32> to vector<2x128xf32>
    %109 = vector.extract_strided_slice %91 {offsets = [0, 256], sizes = [2, 128], strides = [1, 1]} : vector<2x384xf32> to vector<2x128xf32>
    %110 = arith.mulf %99, %109 : vector<2x128xf32>
    %111 = arith.addf %108, %110 : vector<2x128xf32>
    %112 = math.tanh %111 : vector<2x128xf32>
    %cst_33 = arith.constant 1.000000e+00 : f32
    %113 = vector.broadcast %cst_33 : f32 to vector<2x128xf32>
    %114 = arith.subf %113, %107 : vector<2x128xf32>
    %115 = arith.mulf %114, %112 : vector<2x128xf32>
    %116 = arith.mulf %107, %78 : vector<2x128xf32>
    %117 = arith.addf %115, %116 : vector<2x128xf32>
    %cst_34 = arith.constant dense<0.000000e+00> : vector<2x128xf32>
    %118 = tpu.matmul %117, %5, %cst_34 {dimension_numbers = #tpu.dot_dimension_numbers<[1], [0], [0], [1], [0, 0, 1, 1], [], []>} : vector<2x128xf32>, vector<128x128xf32>, vector<2x128xf32> -> vector<2x128xf32>
    %119 = vector.broadcast %6 : vector<1x128xf32> to vector<2x128xf32>
    %120 = arith.addf %118, %119 : vector<2x128xf32>
    %121 = arith.index_cast %c2_i32 : i32 to index
    %c0_35 = arith.constant 0 : index
    %c0_36 = arith.constant 0 : index
    %122 = vector.load %arg6[%121, %c0_35, %c0_36] : memref<8x2x128xf32, #tpu.memory_space<vmem>>, vector<1x2x128xf32>
    %123 = vector.shape_cast %122 : vector<1x2x128xf32> to vector<2x128xf32>
    %124 = vector.shape_cast %120 : vector<2x128xf32> to vector<1x2x128xf32>
    tpu.vector_store %arg6[%121, %c0_35, %c0_36], %124 {strides = array<i32>} : memref<8x2x128xf32, #tpu.memory_space<vmem>>, vector<1x2x128xf32>,
    %c3_i32 = arith.constant 3 : i32
    %125 = arith.index_cast %c3_i32 : i32 to index
    %c0_37 = arith.constant 0 : index
    %c0_38 = arith.constant 0 : index
    %126 = vector.load %arg1[%125, %c0_37, %c0_38] : memref<8x2x384xf32, #tpu.memory_space<vmem>>, vector<1x2x384xf32>
    %127 = vector.shape_cast %126 : vector<1x2x384xf32> to vector<2x384xf32>
    %cst_39 = arith.constant dense<0.000000e+00> : vector<2x384xf32>
    %128 = tpu.matmul %117, %3, %cst_39 {dimension_numbers = #tpu.dot_dimension_numbers<[1], [0], [0], [1], [0, 0, 1, 1], [], []>} : vector<2x128xf32>, vector<128x384xf32>, vector<2x384xf32> -> vector<2x384xf32>
    %129 = vector.broadcast %4 : vector<1x384xf32> to vector<2x384xf32>
    %130 = arith.addf %128, %129 : vector<2x384xf32>
    %131 = vector.extract_strided_slice %127 {offsets = [0, 0], sizes = [2, 128], strides = [1, 1]} : vector<2x384xf32> to vector<2x128xf32>
    %132 = vector.extract_strided_slice %130 {offsets = [0, 0], sizes = [2, 128], strides = [1, 1]} : vector<2x384xf32> to vector<2x128xf32>
    %133 = arith.addf %131, %132 : vector<2x128xf32>
    %134 = arith.negf %133 : vector<2x128xf32>
    %135 = math.exp %134 : vector<2x128xf32>
    %cst_40 = arith.constant 1.000000e+00 : f32
    %136 = vector.broadcast %cst_40 : f32 to vector<2x128xf32>
    %137 = arith.addf %136, %135 : vector<2x128xf32>
    %138 = arith.divf %136, %137 : vector<2x128xf32>
    %139 = vector.extract_strided_slice %127 {offsets = [0, 128], sizes = [2, 128], strides = [1, 1]} : vector<2x384xf32> to vector<2x128xf32>
    %140 = vector.extract_strided_slice %130 {offsets = [0, 128], sizes = [2, 128], strides = [1, 1]} : vector<2x384xf32> to vector<2x128xf32>
    %141 = arith.addf %139, %140 : vector<2x128xf32>
    %142 = arith.negf %141 : vector<2x128xf32>
    %143 = math.exp %142 : vector<2x128xf32>
    %cst_41 = arith.constant 1.000000e+00 : f32
    %144 = vector.broadcast %cst_41 : f32 to vector<2x128xf32>
    %145 = arith.addf %144, %143 : vector<2x128xf32>
    %146 = arith.divf %144, %145 : vector<2x128xf32>
    %147 = vector.extract_strided_slice %127 {offsets = [0, 256], sizes = [2, 128], strides = [1, 1]} : vector<2x384xf32> to vector<2x128xf32>
    %148 = vector.extract_strided_slice %130 {offsets = [0, 256], sizes = [2, 128], strides = [1, 1]} : vector<2x384xf32> to vector<2x128xf32>
    %149 = arith.mulf %138, %148 : vector<2x128xf32>
    %150 = arith.addf %147, %149 : vector<2x128xf32>
    %151 = math.tanh %150 : vector<2x128xf32>
    %cst_42 = arith.constant 1.000000e+00 : f32
    %152 = vector.broadcast %cst_42 : f32 to vector<2x128xf32>
    %153 = arith.subf %152, %146 : vector<2x128xf32>
    %154 = arith.mulf %153, %151 : vector<2x128xf32>
    %155 = arith.mulf %146, %117 : vector<2x128xf32>
    %156 = arith.addf %154, %155 : vector<2x128xf32>
    %cst_43 = arith.constant dense<0.000000e+00> : vector<2x128xf32>
    %157 = tpu.matmul %156, %5, %cst_43 {dimension_numbers = #tpu.dot_dimension_numbers<[1], [0], [0], [1], [0, 0, 1, 1], [], []>} : vector<2x128xf32>, vector<128x128xf32>, vector<2x128xf32> -> vector<2x128xf32>
    %158 = vector.broadcast %6 : vector<1x128xf32> to vector<2x128xf32>
    %159 = arith.addf %157, %158 : vector<2x128xf32>
    %160 = arith.index_cast %c3_i32 : i32 to index
    %c0_44 = arith.constant 0 : index
    %c0_45 = arith.constant 0 : index
    %161 = vector.load %arg6[%160, %c0_44, %c0_45] : memref<8x2x128xf32, #tpu.memory_space<vmem>>, vector<1x2x128xf32>
    %162 = vector.shape_cast %161 : vector<1x2x128xf32> to vector<2x128xf32>
    %163 = vector.shape_cast %159 : vector<2x128xf32> to vector<1x2x128xf32>
    tpu.vector_store %arg6[%160, %c0_44, %c0_45], %163 {strides = array<i32>} : memref<8x2x128xf32, #tpu.memory_space<vmem>>, vector<1x2x128xf32>,
    %c4_i32 = arith.constant 4 : i32
    %164 = arith.index_cast %c4_i32 : i32 to index
    %c0_46 = arith.constant 0 : index
    %c0_47 = arith.constant 0 : index
    %165 = vector.load %arg1[%164, %c0_46, %c0_47] : memref<8x2x384xf32, #tpu.memory_space<vmem>>, vector<1x2x384xf32>
    %166 = vector.shape_cast %165 : vector<1x2x384xf32> to vector<2x384xf32>
    %cst_48 = arith.constant dense<0.000000e+00> : vector<2x384xf32>
    %167 = tpu.matmul %156, %3, %cst_48 {dimension_numbers = #tpu.dot_dimension_numbers<[1], [0], [0], [1], [0, 0, 1, 1], [], []>} : vector<2x128xf32>, vector<128x384xf32>, vector<2x384xf32> -> vector<2x384xf32>
    %168 = vector.broadcast %4 : vector<1x384xf32> to vector<2x384xf32>
    %169 = arith.addf %167, %168 : vector<2x384xf32>
    %170 = vector.extract_strided_slice %166 {offsets = [0, 0], sizes = [2, 128], strides = [1, 1]} : vector<2x384xf32> to vector<2x128xf32>
    %171 = vector.extract_strided_slice %169 {offsets = [0, 0], sizes = [2, 128], strides = [1, 1]} : vector<2x384xf32> to vector<2x128xf32>
    %172 = arith.addf %170, %171 : vector<2x128xf32>
    %173 = arith.negf %172 : vector<2x128xf32>
    %174 = math.exp %173 : vector<2x128xf32>
    %cst_49 = arith.constant 1.000000e+00 : f32
    %175 = vector.broadcast %cst_49 : f32 to vector<2x128xf32>
    %176 = arith.addf %175, %174 : vector<2x128xf32>
    %177 = arith.divf %175, %176 : vector<2x128xf32>
    %178 = vector.extract_strided_slice %166 {offsets = [0, 128], sizes = [2, 128], strides = [1, 1]} : vector<2x384xf32> to vector<2x128xf32>
    %179 = vector.extract_strided_slice %169 {offsets = [0, 128], sizes = [2, 128], strides = [1, 1]} : vector<2x384xf32> to vector<2x128xf32>
    %180 = arith.addf %178, %179 : vector<2x128xf32>
    %181 = arith.negf %180 : vector<2x128xf32>
    %182 = math.exp %181 : vector<2x128xf32>
    %cst_50 = arith.constant 1.000000e+00 : f32
    %183 = vector.broadcast %cst_50 : f32 to vector<2x128xf32>
    %184 = arith.addf %183, %182 : vector<2x128xf32>
    %185 = arith.divf %183, %184 : vector<2x128xf32>
    %186 = vector.extract_strided_slice %166 {offsets = [0, 256], sizes = [2, 128], strides = [1, 1]} : vector<2x384xf32> to vector<2x128xf32>
    %187 = vector.extract_strided_slice %169 {offsets = [0, 256], sizes = [2, 128], strides = [1, 1]} : vector<2x384xf32> to vector<2x128xf32>
    %188 = arith.mulf %177, %187 : vector<2x128xf32>
    %189 = arith.addf %186, %188 : vector<2x128xf32>
    %190 = math.tanh %189 : vector<2x128xf32>
    %cst_51 = arith.constant 1.000000e+00 : f32
    %191 = vector.broadcast %cst_51 : f32 to vector<2x128xf32>
    %192 = arith.subf %191, %185 : vector<2x128xf32>
    %193 = arith.mulf %192, %190 : vector<2x128xf32>
    %194 = arith.mulf %185, %156 : vector<2x128xf32>
    %195 = arith.addf %193, %194 : vector<2x128xf32>
    %cst_52 = arith.constant dense<0.000000e+00> : vector<2x128xf32>
    %196 = tpu.matmul %195, %5, %cst_52 {dimension_numbers = #tpu.dot_dimension_numbers<[1], [0], [0], [1], [0, 0, 1, 1], [], []>} : vector<2x128xf32>, vector<128x128xf32>, vector<2x128xf32> -> vector<2x128xf32>
    %197 = vector.broadcast %6 : vector<1x128xf32> to vector<2x128xf32>
    %198 = arith.addf %196, %197 : vector<2x128xf32>
    %199 = arith.index_cast %c4_i32 : i32 to index
    %c0_53 = arith.constant 0 : index
    %c0_54 = arith.constant 0 : index
    %200 = vector.load %arg6[%199, %c0_53, %c0_54] : memref<8x2x128xf32, #tpu.memory_space<vmem>>, vector<1x2x128xf32>
    %201 = vector.shape_cast %200 : vector<1x2x128xf32> to vector<2x128xf32>
    %202 = vector.shape_cast %198 : vector<2x128xf32> to vector<1x2x128xf32>
    tpu.vector_store %arg6[%199, %c0_53, %c0_54], %202 {strides = array<i32>} : memref<8x2x128xf32, #tpu.memory_space<vmem>>, vector<1x2x128xf32>,
    %c5_i32 = arith.constant 5 : i32
    %203 = arith.index_cast %c5_i32 : i32 to index
    %c0_55 = arith.constant 0 : index
    %c0_56 = arith.constant 0 : index
    %204 = vector.load %arg1[%203, %c0_55, %c0_56] : memref<8x2x384xf32, #tpu.memory_space<vmem>>, vector<1x2x384xf32>
    %205 = vector.shape_cast %204 : vector<1x2x384xf32> to vector<2x384xf32>
    %cst_57 = arith.constant dense<0.000000e+00> : vector<2x384xf32>
    %206 = tpu.matmul %195, %3, %cst_57 {dimension_numbers = #tpu.dot_dimension_numbers<[1], [0], [0], [1], [0, 0, 1, 1], [], []>} : vector<2x128xf32>, vector<128x384xf32>, vector<2x384xf32> -> vector<2x384xf32>
    %207 = vector.broadcast %4 : vector<1x384xf32> to vector<2x384xf32>
    %208 = arith.addf %206, %207 : vector<2x384xf32>
    %209 = vector.extract_strided_slice %205 {offsets = [0, 0], sizes = [2, 128], strides = [1, 1]} : vector<2x384xf32> to vector<2x128xf32>
    %210 = vector.extract_strided_slice %208 {offsets = [0, 0], sizes = [2, 128], strides = [1, 1]} : vector<2x384xf32> to vector<2x128xf32>
    %211 = arith.addf %209, %210 : vector<2x128xf32>
    %212 = arith.negf %211 : vector<2x128xf32>
    %213 = math.exp %212 : vector<2x128xf32>
    %cst_58 = arith.constant 1.000000e+00 : f32
    %214 = vector.broadcast %cst_58 : f32 to vector<2x128xf32>
    %215 = arith.addf %214, %213 : vector<2x128xf32>
    %216 = arith.divf %214, %215 : vector<2x128xf32>
    %217 = vector.extract_strided_slice %205 {offsets = [0, 128], sizes = [2, 128], strides = [1, 1]} : vector<2x384xf32> to vector<2x128xf32>
    %218 = vector.extract_strided_slice %208 {offsets = [0, 128], sizes = [2, 128], strides = [1, 1]} : vector<2x384xf32> to vector<2x128xf32>
    %219 = arith.addf %217, %218 : vector<2x128xf32>
    %220 = arith.negf %219 : vector<2x128xf32>
    %221 = math.exp %220 : vector<2x128xf32>
    %cst_59 = arith.constant 1.000000e+00 : f32
    %222 = vector.broadcast %cst_59 : f32 to vector<2x128xf32>
    %223 = arith.addf %222, %221 : vector<2x128xf32>
    %224 = arith.divf %222, %223 : vector<2x128xf32>
    %225 = vector.extract_strided_slice %205 {offsets = [0, 256], sizes = [2, 128], strides = [1, 1]} : vector<2x384xf32> to vector<2x128xf32>
    %226 = vector.extract_strided_slice %208 {offsets = [0, 256], sizes = [2, 128], strides = [1, 1]} : vector<2x384xf32> to vector<2x128xf32>
    %227 = arith.mulf %216, %226 : vector<2x128xf32>
    %228 = arith.addf %225, %227 : vector<2x128xf32>
    %229 = math.tanh %228 : vector<2x128xf32>
    %cst_60 = arith.constant 1.000000e+00 : f32
    %230 = vector.broadcast %cst_60 : f32 to vector<2x128xf32>
    %231 = arith.subf %230, %224 : vector<2x128xf32>
    %232 = arith.mulf %231, %229 : vector<2x128xf32>
    %233 = arith.mulf %224, %195 : vector<2x128xf32>
    %234 = arith.addf %232, %233 : vector<2x128xf32>
    %cst_61 = arith.constant dense<0.000000e+00> : vector<2x128xf32>
    %235 = tpu.matmul %234, %5, %cst_61 {dimension_numbers = #tpu.dot_dimension_numbers<[1], [0], [0], [1], [0, 0, 1, 1], [], []>} : vector<2x128xf32>, vector<128x128xf32>, vector<2x128xf32> -> vector<2x128xf32>
    %236 = vector.broadcast %6 : vector<1x128xf32> to vector<2x128xf32>
    %237 = arith.addf %235, %236 : vector<2x128xf32>
    %238 = arith.index_cast %c5_i32 : i32 to index
    %c0_62 = arith.constant 0 : index
    %c0_63 = arith.constant 0 : index
    %239 = vector.load %arg6[%238, %c0_62, %c0_63] : memref<8x2x128xf32, #tpu.memory_space<vmem>>, vector<1x2x128xf32>
    %240 = vector.shape_cast %239 : vector<1x2x128xf32> to vector<2x128xf32>
    %241 = vector.shape_cast %237 : vector<2x128xf32> to vector<1x2x128xf32>
    tpu.vector_store %arg6[%238, %c0_62, %c0_63], %241 {strides = array<i32>} : memref<8x2x128xf32, #tpu.memory_space<vmem>>, vector<1x2x128xf32>,
    %c6_i32 = arith.constant 6 : i32
    %242 = arith.index_cast %c6_i32 : i32 to index
    %c0_64 = arith.constant 0 : index
    %c0_65 = arith.constant 0 : index
    %243 = vector.load %arg1[%242, %c0_64, %c0_65] : memref<8x2x384xf32, #tpu.memory_space<vmem>>, vector<1x2x384xf32>
    %244 = vector.shape_cast %243 : vector<1x2x384xf32> to vector<2x384xf32>
    %cst_66 = arith.constant dense<0.000000e+00> : vector<2x384xf32>
    %245 = tpu.matmul %234, %3, %cst_66 {dimension_numbers = #tpu.dot_dimension_numbers<[1], [0], [0], [1], [0, 0, 1, 1], [], []>} : vector<2x128xf32>, vector<128x384xf32>, vector<2x384xf32> -> vector<2x384xf32>
    %246 = vector.broadcast %4 : vector<1x384xf32> to vector<2x384xf32>
    %247 = arith.addf %245, %246 : vector<2x384xf32>
    %248 = vector.extract_strided_slice %244 {offsets = [0, 0], sizes = [2, 128], strides = [1, 1]} : vector<2x384xf32> to vector<2x128xf32>
    %249 = vector.extract_strided_slice %247 {offsets = [0, 0], sizes = [2, 128], strides = [1, 1]} : vector<2x384xf32> to vector<2x128xf32>
    %250 = arith.addf %248, %249 : vector<2x128xf32>
    %251 = arith.negf %250 : vector<2x128xf32>
    %252 = math.exp %251 : vector<2x128xf32>
    %cst_67 = arith.constant 1.000000e+00 : f32
    %253 = vector.broadcast %cst_67 : f32 to vector<2x128xf32>
    %254 = arith.addf %253, %252 : vector<2x128xf32>
    %255 = arith.divf %253, %254 : vector<2x128xf32>
    %256 = vector.extract_strided_slice %244 {offsets = [0, 128], sizes = [2, 128], strides = [1, 1]} : vector<2x384xf32> to vector<2x128xf32>
    %257 = vector.extract_strided_slice %247 {offsets = [0, 128], sizes = [2, 128], strides = [1, 1]} : vector<2x384xf32> to vector<2x128xf32>
    %258 = arith.addf %256, %257 : vector<2x128xf32>
    %259 = arith.negf %258 : vector<2x128xf32>
    %260 = math.exp %259 : vector<2x128xf32>
    %cst_68 = arith.constant 1.000000e+00 : f32
    %261 = vector.broadcast %cst_68 : f32 to vector<2x128xf32>
    %262 = arith.addf %261, %260 : vector<2x128xf32>
    %263 = arith.divf %261, %262 : vector<2x128xf32>
    %264 = vector.extract_strided_slice %244 {offsets = [0, 256], sizes = [2, 128], strides = [1, 1]} : vector<2x384xf32> to vector<2x128xf32>
    %265 = vector.extract_strided_slice %247 {offsets = [0, 256], sizes = [2, 128], strides = [1, 1]} : vector<2x384xf32> to vector<2x128xf32>
    %266 = arith.mulf %255, %265 : vector<2x128xf32>
    %267 = arith.addf %264, %266 : vector<2x128xf32>
    %268 = math.tanh %267 : vector<2x128xf32>
    %cst_69 = arith.constant 1.000000e+00 : f32
    %269 = vector.broadcast %cst_69 : f32 to vector<2x128xf32>
    %270 = arith.subf %269, %263 : vector<2x128xf32>
    %271 = arith.mulf %270, %268 : vector<2x128xf32>
    %272 = arith.mulf %263, %234 : vector<2x128xf32>
    %273 = arith.addf %271, %272 : vector<2x128xf32>
    %cst_70 = arith.constant dense<0.000000e+00> : vector<2x128xf32>
    %274 = tpu.matmul %273, %5, %cst_70 {dimension_numbers = #tpu.dot_dimension_numbers<[1], [0], [0], [1], [0, 0, 1, 1], [], []>} : vector<2x128xf32>, vector<128x128xf32>, vector<2x128xf32> -> vector<2x128xf32>
    %275 = vector.broadcast %6 : vector<1x128xf32> to vector<2x128xf32>
    %276 = arith.addf %274, %275 : vector<2x128xf32>
    %277 = arith.index_cast %c6_i32 : i32 to index
    %c0_71 = arith.constant 0 : index
    %c0_72 = arith.constant 0 : index
    %278 = vector.load %arg6[%277, %c0_71, %c0_72] : memref<8x2x128xf32, #tpu.memory_space<vmem>>, vector<1x2x128xf32>
    %279 = vector.shape_cast %278 : vector<1x2x128xf32> to vector<2x128xf32>
    %280 = vector.shape_cast %276 : vector<2x128xf32> to vector<1x2x128xf32>
    tpu.vector_store %arg6[%277, %c0_71, %c0_72], %280 {strides = array<i32>} : memref<8x2x128xf32, #tpu.memory_space<vmem>>, vector<1x2x128xf32>,
    %c7_i32 = arith.constant 7 : i32
    %281 = arith.index_cast %c7_i32 : i32 to index
    %c0_73 = arith.constant 0 : index
    %c0_74 = arith.constant 0 : index
    %282 = vector.load %arg1[%281, %c0_73, %c0_74] : memref<8x2x384xf32, #tpu.memory_space<vmem>>, vector<1x2x384xf32>
    %283 = vector.shape_cast %282 : vector<1x2x384xf32> to vector<2x384xf32>
    %cst_75 = arith.constant dense<0.000000e+00> : vector<2x384xf32>
    %284 = tpu.matmul %273, %3, %cst_75 {dimension_numbers = #tpu.dot_dimension_numbers<[1], [0], [0], [1], [0, 0, 1, 1], [], []>} : vector<2x128xf32>, vector<128x384xf32>, vector<2x384xf32> -> vector<2x384xf32>
    %285 = vector.broadcast %4 : vector<1x384xf32> to vector<2x384xf32>
    %286 = arith.addf %284, %285 : vector<2x384xf32>
    %287 = vector.extract_strided_slice %283 {offsets = [0, 0], sizes = [2, 128], strides = [1, 1]} : vector<2x384xf32> to vector<2x128xf32>
    %288 = vector.extract_strided_slice %286 {offsets = [0, 0], sizes = [2, 128], strides = [1, 1]} : vector<2x384xf32> to vector<2x128xf32>
    %289 = arith.addf %287, %288 : vector<2x128xf32>
    %290 = arith.negf %289 : vector<2x128xf32>
    %291 = math.exp %290 : vector<2x128xf32>
    %cst_76 = arith.constant 1.000000e+00 : f32
    %292 = vector.broadcast %cst_76 : f32 to vector<2x128xf32>
    %293 = arith.addf %292, %291 : vector<2x128xf32>
    %294 = arith.divf %292, %293 : vector<2x128xf32>
    %295 = vector.extract_strided_slice %283 {offsets = [0, 128], sizes = [2, 128], strides = [1, 1]} : vector<2x384xf32> to vector<2x128xf32>
    %296 = vector.extract_strided_slice %286 {offsets = [0, 128], sizes = [2, 128], strides = [1, 1]} : vector<2x384xf32> to vector<2x128xf32>
    %297 = arith.addf %295, %296 : vector<2x128xf32>
    %298 = arith.negf %297 : vector<2x128xf32>
    %299 = math.exp %298 : vector<2x128xf32>
    %cst_77 = arith.constant 1.000000e+00 : f32
    %300 = vector.broadcast %cst_77 : f32 to vector<2x128xf32>
    %301 = arith.addf %300, %299 : vector<2x128xf32>
    %302 = arith.divf %300, %301 : vector<2x128xf32>
    %303 = vector.extract_strided_slice %283 {offsets = [0, 256], sizes = [2, 128], strides = [1, 1]} : vector<2x384xf32> to vector<2x128xf32>
    %304 = vector.extract_strided_slice %286 {offsets = [0, 256], sizes = [2, 128], strides = [1, 1]} : vector<2x384xf32> to vector<2x128xf32>
    %305 = arith.mulf %294, %304 : vector<2x128xf32>
    %306 = arith.addf %303, %305 : vector<2x128xf32>
    %307 = math.tanh %306 : vector<2x128xf32>
    %cst_78 = arith.constant 1.000000e+00 : f32
    %308 = vector.broadcast %cst_78 : f32 to vector<2x128xf32>
    %309 = arith.subf %308, %302 : vector<2x128xf32>
    %310 = arith.mulf %309, %307 : vector<2x128xf32>
    %311 = arith.mulf %302, %273 : vector<2x128xf32>
    %312 = arith.addf %310, %311 : vector<2x128xf32>
    %cst_79 = arith.constant dense<0.000000e+00> : vector<2x128xf32>
    %313 = tpu.matmul %312, %5, %cst_79 {dimension_numbers = #tpu.dot_dimension_numbers<[1], [0], [0], [1], [0, 0, 1, 1], [], []>} : vector<2x128xf32>, vector<128x128xf32>, vector<2x128xf32> -> vector<2x128xf32>
    %314 = vector.broadcast %6 : vector<1x128xf32> to vector<2x128xf32>
    %315 = arith.addf %313, %314 : vector<2x128xf32>
    %316 = arith.index_cast %c7_i32 : i32 to index
    %c0_80 = arith.constant 0 : index
    %c0_81 = arith.constant 0 : index
    %317 = vector.load %arg6[%316, %c0_80, %c0_81] : memref<8x2x128xf32, #tpu.memory_space<vmem>>, vector<1x2x128xf32>
    %318 = vector.shape_cast %317 : vector<1x2x128xf32> to vector<2x128xf32>
    %319 = vector.shape_cast %315 : vector<2x128xf32> to vector<1x2x128xf32>
    tpu.vector_store %arg6[%316, %c0_80, %c0_81], %319 {strides = array<i32>} : memref<8x2x128xf32, #tpu.memory_space<vmem>>, vector<1x2x128xf32>,
    %c8_i32 = arith.constant 8 : i32
    %c0_82 = arith.constant 0 : index
    %c0_83 = arith.constant 0 : index
    %320 = vector.load %arg7[%c0_82, %c0_83] : memref<2x128xf32, #tpu.memory_space<vmem>>, vector<2x128xf32>
    tpu.vector_store %arg7[%c0_82, %c0_83], %312 {strides = array<i32>} : memref<2x128xf32, #tpu.memory_space<vmem>>, vector<2x128xf32>,
    return
  }
  func.func @transform_0(%arg0: i32) -> (i32, i32, i32) {
    %c0_i32 = arith.constant 0 : i32
    %c0_i32_0 = arith.constant 0 : i32
    %c0_i32_1 = arith.constant 0 : i32
    return %arg0, %c0_i32, %c0_i32_0 : i32, i32, i32
  }
  func.func @transform_1(%arg0: i32) -> (i32, i32) {
    %c0_i32 = arith.constant 0 : i32
    %c0_i32_0 = arith.constant 0 : i32
    %c0_i32_1 = arith.constant 0 : i32
    return %c0_i32, %c0_i32_0 : i32, i32
  }
  func.func @transform_2(%arg0: i32) -> (i32, i32) {
    %c0_i32 = arith.constant 0 : i32
    %c0_i32_0 = arith.constant 0 : i32
    %c0_i32_1 = arith.constant 0 : i32
    return %c0_i32, %c0_i32_0 : i32, i32
  }
  func.func @transform_3(%arg0: i32) -> (i32, i32) {
    %c0_i32 = arith.constant 0 : i32
    %c0_i32_0 = arith.constant 0 : i32
    %c0_i32_1 = arith.constant 0 : i32
    return %c0_i32, %c0_i32_0 : i32, i32
  }
  func.func @transform_4(%arg0: i32) -> (i32, i32) {
    %c0_i32 = arith.constant 0 : i32
    %c0_i32_0 = arith.constant 0 : i32
    %c0_i32_1 = arith.constant 0 : i32
    return %c0_i32, %c0_i32_0 : i32, i32
  }
  func.func @transform_5(%arg0: i32) -> (i32, i32, i32) {
    %c0_i32 = arith.constant 0 : i32
    %c0_i32_0 = arith.constant 0 : i32
    %c0_i32_1 = arith.constant 0 : i32
    return %arg0, %c0_i32, %c0_i32_0 : i32, i32, i32
  }
}

</mosaic_0001>

<llo_original>
// kernel: gru_forward.1
$region0: #{gru_forward.1}
  #allocation0 [shape = 'u32[]', space=smem, size = 0x4, offset = 0x4, fixed_abs, tag = 'smem constant byte address 0x4 - core index']
  #allocation1 [shape = 'u32[144,128]{1,0:T(1,128)}', space=vmem, size = 0x12000, scoped, tag = 'internal scratch']
  #allocation2 [shape = 'f32[2,128]{1,0:T(2,128)}', space=vmem, size = 0x400, scoped, tag = 'scratch operand']
  %s0 = inlined_call_operand.vmem [shape: f32[8,2,384], index: 0, kind: input, shape index: {}]
  %s1 = inlined_call_operand.vmem [shape: f32[128,384], index: 1, kind: input, shape index: {}]
  %s2 = inlined_call_operand.vmem [shape: f32[1,384], index: 2, kind: input, shape index: {}]
  %s3 = inlined_call_operand.vmem [shape: f32[128,128], index: 3, kind: input, shape index: {}]
  %s4 = inlined_call_operand.vmem [shape: f32[1,128], index: 4, kind: input, shape index: {}]
  %s5 = inlined_call_operand.vmem [shape: f32[8,2,128], index: 5, kind: output, shape index: {}]
  %s6 = sld [smem:[#allocation0]]
  $region34: #{gru_forward.1} parent=0
    _
  %s8 = ssub.s32 1, %s6
  %s9 = scalar_select 0, %s8, %s6
  // Predicated region
  $region2: #{gru_forward.1} parent=0 // pred_check
    _
  $region3: #{gru_forward.1} parent=0 // pred_check_branch
    %11 = sbr.rel (0) target = $region5
  $region4: #{gru_forward.1} parent=0 // pred_region
    _
  $region5: #{gru_forward.1} parent=0 // pred_fallthru
    _
  // Predicated region
  $region6: #{gru_forward.1} parent=0 // pred_check
    _
  $region7: #{gru_forward.1} parent=0 // pred_check_branch
    %13 = sbr.rel (0) target = $region9
  $region8: #{gru_forward.1} parent=0 // pred_region
    _
  $region9: #{gru_forward.1} parent=0 // pred_fallthru
    _
  // Predicated region
  $region10: #{gru_forward.1} parent=0 // pred_check
    _
  $region11: #{gru_forward.1} parent=0 // pred_check_branch
    %15 = sbr.rel (0) target = $region13
  $region12: #{gru_forward.1} parent=0 // pred_region
    _
  $region13: #{gru_forward.1} parent=0 // pred_fallthru
    _
  // Predicated region
  $region14: #{gru_forward.1} parent=0 // pred_check
    _
  $region15: #{gru_forward.1} parent=0 // pred_check_branch
    %17 = sbr.rel (0) target = $region17
  $region16: #{gru_forward.1} parent=0 // pred_region
    _
  $region17: #{gru_forward.1} parent=0 // pred_fallthru
    _
  // Predicated region
  $region18: #{gru_forward.1} parent=0 // pred_check
    _
  $region19: #{gru_forward.1} parent=0 // pred_check_branch
    %19 = sbr.rel (0) target = $region21
  $region20: #{gru_forward.1} parent=0 // pred_region
    _
  $region21: #{gru_forward.1} parent=0 // pred_fallthru
    _
  %p20 = scmp.eq.s32.totalorder 0, 0
  // Predicated region
  $region22: #{gru_forward.1} parent=0 // pred_check
    %p21 = pneg %p20
  $region23: #{gru_forward.1} parent=0 // pred_check_branch
    %23 = sbr.rel (%p21) target = $region25
  $region24: #{gru_forward.1} parent=0 // pred_region
    %24 = vst [vmem:[#allocation2] sm:$0x3] 0.0
  $region25: #{gru_forward.1} parent=0 // pred_fallthru
    _
  %v25 = vld [vmem:[%s1] sm:$0xff]
  %v26 = vld [vmem:[%s1 + $0x8] sm:$0xff]
  %v27 = vld [vmem:[%s1 + $0x10] sm:$0xff]
  %v28 = vld [vmem:[%s1 + $0x18] sm:$0xff]
  %v29 = vld [vmem:[%s1 + $0x20] sm:$0xff]
  %v30 = vld [vmem:[%s1 + $0x28] sm:$0xff]
  %v31 = vld [vmem:[%s1 + $0x30] sm:$0xff]
  %v32 = vld [vmem:[%s1 + $0x38] sm:$0xff]
  %v33 = vld [vmem:[%s1 + $0x40] sm:$0xff]
  %v34 = vld [vmem:[%s1 + $0x48] sm:$0xff]
  %v35 = vld [vmem:[%s1 + $0x50] sm:$0xff]
  %v36 = vld [vmem:[%s1 + $0x58] sm:$0xff]
  %v37 = vld [vmem:[%s1 + $0x60] sm:$0xff]
  %v38 = vld [vmem:[%s1 + $0x68] sm:$0xff]
  %v39 = vld [vmem:[%s1 + $0x70] sm:$0xff]
  %v40 = vld [vmem:[%s1 + $0x78] sm:$0xff]
  %v41 = vld [vmem:[%s1 + $0x80] sm:$0xff]
  %v42 = vld [vmem:[%s1 + $0x88] sm:$0xff]
  %v43 = vld [vmem:[%s1 + $0x90] sm:$0xff]
  %v44 = vld [vmem:[%s1 + $0x98] sm:$0xff]
  %v45 = vld [vmem:[%s1 + $0xa0] sm:$0xff]
  %v46 = vld [vmem:[%s1 + $0xa8] sm:$0xff]
  %v47 = vld [vmem:[%s1 + $0xb0] sm:$0xff]
  %v48 = vld [vmem:[%s1 + $0xb8] sm:$0xff]
  %v49 = vld [vmem:[%s1 + $0xc0] sm:$0xff]
  %v50 = vld [vmem:[%s1 + $0xc8] sm:$0xff]
  %v51 = vld [vmem:[%s1 + $0xd0] sm:$0xff]
  %v52 = vld [vmem:[%s1 + $0xd8] sm:$0xff]
  %v53 = vld [vmem:[%s1 + $0xe0] sm:$0xff]
  %v54 = vld [vmem:[%s1 + $0xe8] sm:$0xff]
  %v55 = vld [vmem:[%s1 + $0xf0] sm:$0xff]
  %v56 = vld [vmem:[%s1 + $0xf8] sm:$0xff]
  %v57 = vld [vmem:[%s1 + $0x100] sm:$0xff]
  %v58 = vld [vmem:[%s1 + $0x108] sm:$0xff]
  %v59 = vld [vmem:[%s1 + $0x110] sm:$0xff]
  %v60 = vld [vmem:[%s1 + $0x118] sm:$0xff]
  %v61 = vld [vmem:[%s1 + $0x120] sm:$0xff]
  %v62 = vld [vmem:[%s1 + $0x128] sm:$0xff]
  %v63 = vld [vmem:[%s1 + $0x130] sm:$0xff]
  %v64 = vld [vmem:[%s1 + $0x138] sm:$0xff]
  %v65 = vld [vmem:[%s1 + $0x140] sm:$0xff]
  %v66 = vld [vmem:[%s1 + $0x148] sm:$0xff]
  %v67 = vld [vmem:[%s1 + $0x150] sm:$0xff]
  %v68 = vld [vmem:[%s1 + $0x158] sm:$0xff]
  %v69 = vld [vmem:[%s1 + $0x160] sm:$0xff]
  %v70 = vld [vmem:[%s1 + $0x168] sm:$0xff]
  %v71 = vld [vmem:[%s1 + $0x170] sm:$0xff]
  %v72 = vld [vmem:[%s1 + $0x178] sm:$0xff]
  %v73 = vld [vmem:[%s2] sm:$0x7]
  %v74 = vld [vmem:[%s3] sm:$0xff]
  %v75 = vld [vmem:[%s3 + $0x8] sm:$0xff]
  %v76 = vld [vmem:[%s3 + $0x10] sm:$0xff]
  %v77 = vld [vmem:[%s3 + $0x18] sm:$0xff]
  %v78 = vld [vmem:[%s3 + $0x20] sm:$0xff]
  %v79 = vld [vmem:[%s3 + $0x28] sm:$0xff]
  %v80 = vld [vmem:[%s3 + $0x30] sm:$0xff]
  %v81 = vld [vmem:[%s3 + $0x38] sm:$0xff]
  %v82 = vld [vmem:[%s3 + $0x40] sm:$0xff]
  %v83 = vld [vmem:[%s3 + $0x48] sm:$0xff]
  %v84 = vld [vmem:[%s3 + $0x50] sm:$0xff]
  %v85 = vld [vmem:[%s3 + $0x58] sm:$0xff]
  %v86 = vld [vmem:[%s3 + $0x60] sm:$0xff]
  %v87 = vld [vmem:[%s3 + $0x68] sm:$0xff]
  %v88 = vld [vmem:[%s3 + $0x70] sm:$0xff]
  %v89 = vld [vmem:[%s3 + $0x78] sm:$0xff]
  %v90 = vld [vmem:[%s4] sm:$0x1]
  %v91 = vld [vmem:[#allocation2] sm:$0x3]
  %v92 = vld [vmem:[%s0] sm:$0x3f]
  %v94 = vlaneseq
  %v95 = vshrl.u32 %v94, 7
  %v96 = vsub.s32 0, %v95
  %v97 = vrot.slane %v73, %v96
  %v98 = vlaneseq
  %v99 = vshrl.u32 %v98, 7
  %v100 = vsub.s32 1, %v99
  %v101 = vrot.slane %v73, %v100
  %v102 = vlaneseq
  %v103 = vshrl.u32 %v102, 7
  %v104 = vsub.s32 2, %v103
  %v105 = vrot.slane %v73, %v104
  %109 = vmatprep.subr.mxu0 %v26
  %110 = vmatpush1.msra.mxu0 %v25
  %111 = vmatprep.subr.mxu0 %v29
  %112 = vmatpush1.msra.mxu0 %v28
  %113 = vmatprep.subr.mxu0 %v32
  %114 = vmatpush1.msra.mxu0 %v31
  %115 = vmatprep.subr.mxu0 %v35
  %116 = vmatpush1.msra.mxu0 %v34
  %117 = vmatprep.subr.mxu0 %v38
  %118 = vmatpush1.msra.mxu0 %v37
  %119 = vmatprep.subr.mxu0 %v41
  %120 = vmatpush1.msra.mxu0 %v40
  %121 = vmatprep.subr.mxu0 %v44
  %122 = vmatpush1.msra.mxu0 %v43
  %123 = vmatprep.subr.mxu0 %v47
  %124 = vmatpush1.msra.mxu0 %v46
  %125 = vmatprep.subr.mxu0 %v50
  %126 = vmatpush1.msra.mxu0 %v49
  %127 = vmatprep.subr.mxu0 %v53
  %128 = vmatpush1.msra.mxu0 %v52
  %129 = vmatprep.subr.mxu0 %v56
  %130 = vmatpush1.msra.mxu0 %v55
  %131 = vmatprep.subr.mxu0 %v59
  %132 = vmatpush1.msra.mxu0 %v58
  %133 = vmatprep.subr.mxu0 %v62
  %134 = vmatpush1.msra.mxu0 %v61
  %135 = vmatprep.subr.mxu0 %v65
  %136 = vmatpush1.msra.mxu0 %v64
  %137 = vmatprep.subr.mxu0 %v68
  %138 = vmatpush1.msra.mxu0 %v67
  %139 = vmatprep.subr.mxu0 %v71
  %140 = vmatpush1.msra.mxu0 %v70
  %141 = vmatprep.subr.mxu0 0.0
  %142 = vmatpush1.msra.mxu0 0.0
  %143 = vmatprep.subr.mxu0 0.0
  %144 = vmatpush1.msra.mxu0 0.0
  %145 = vmatprep.subr.mxu0 0.0
  %146 = vmatpush1.msra.mxu0 0.0
  %147 = vmatprep.subr.mxu0 0.0
  %148 = vmatpush1.msra.mxu0 0.0
  %149 = vmatprep.subr.mxu0 0.0
  %150 = vmatpush1.msra.mxu0 0.0
  %151 = vmatprep.subr.mxu0 0.0
  %152 = vmatpush1.msra.mxu0 0.0
  %153 = vmatprep.subr.mxu0 0.0
  %154 = vmatpush1.msra.mxu0 0.0
  %155 = vmatprep.subr.mxu0 0.0
  %156 = vmatpush1.msra.mxu0 0.0
  %157 = vmatprep.subr.mxu0 0.0
  %158 = vmatpush1.msra.mxu0 0.0
  %159 = vmatprep.subr.mxu0 0.0
  %160 = vmatpush1.msra.mxu0 0.0
  %161 = vmatprep.subr.mxu0 0.0
  %162 = vmatpush1.msra.mxu0 0.0
  %163 = vmatprep.subr.mxu0 0.0
  %164 = vmatpush1.msra.mxu0 0.0
  %165 = vmatprep.subr.mxu0 0.0
  %166 = vmatpush1.msra.mxu0 0.0
  %167 = vmatprep.subr.mxu0 0.0
  %168 = vmatpush1.msra.mxu0 0.0
  %169 = vmatprep.subr.mxu0 0.0
  %170 = vmatpush1.msra.mxu0 0.0
  %171 = vmatprep.subr.mxu0 0.0
  %172 = vmatpush1.msra.mxu0 0.0
  %173 = vmatprep.mubr.f32.mxu0 0.0
  %174 = vmatmul.mubr.f32.gmra.mrb[0].mxu0 %v91
  %v175 = vpop.f32.mrb[0].mxu0
  %v176 = vadd.f32 %v97, %v175
  %v177 = vpop.f32.mrb[0].mxu0
  %v178 = vadd.f32 %v101, %v177
  %179 = vdwg.mxu0
  %180 = vmatprep.subr.mxu0 0.0
  %181 = vmatpush1.msra.mxu0 %v27
  %182 = vmatprep.subr.mxu0 0.0
  %183 = vmatpush1.msra.mxu0 %v30
  %184 = vmatprep.subr.mxu0 0.0
  %185 = vmatpush1.msra.mxu0 %v33
  %186 = vmatprep.subr.mxu0 0.0
  %187 = vmatpush1.msra.mxu0 %v36
  %188 = vmatprep.subr.mxu0 0.0
  %189 = vmatpush1.msra.mxu0 %v39
  %190 = vmatprep.subr.mxu0 0.0
  %191 = vmatpush1.msra.mxu0 %v42
  %192 = vmatprep.subr.mxu0 0.0
  %193 = vmatpush1.msra.mxu0 %v45
  %194 = vmatprep.subr.mxu0 0.0
  %195 = vmatpush1.msra.mxu0 %v48
  %196 = vmatprep.subr.mxu0 0.0
  %197 = vmatpush1.msra.mxu0 %v51
  %198 = vmatprep.subr.mxu0 0.0
  %199 = vmatpush1.msra.mxu0 %v54
  %200 = vmatprep.subr.mxu0 0.0
  %201 = vmatpush1.msra.mxu0 %v57
  %202 = vmatprep.subr.mxu0 0.0
  %203 = vmatpush1.msra.mxu0 %v60
  %204 = vmatprep.subr.mxu0 0.0
  %205 = vmatpush1.msra.mxu0 %v63
  %206 = vmatprep.subr.mxu0 0.0
  %207 = vmatpush1.msra.mxu0 %v66
  %208 = vmatprep.subr.mxu0 0.0
  %209 = vmatpush1.msra.mxu0 %v69
  %210 = vmatprep.subr.mxu0 0.0
  %211 = vmatpush1.msra.mxu0 %v72
  %212 = vmatprep.subr.mxu0 0.0
  %213 = vmatpush1.msra.mxu0 0.0
  %214 = vmatprep.subr.mxu0 0.0
  %215 = vmatpush1.msra.mxu0 0.0
  %216 = vmatprep.subr.mxu0 0.0
  %217 = vmatpush1.msra.mxu0 0.0
  %218 = vmatprep.subr.mxu0 0.0
  %219 = vmatpush1.msra.mxu0 0.0
  %220 = vmatprep.subr.mxu0 0.0
  %221 = vmatpush1.msra.mxu0 0.0
  %222 = vmatprep.subr.mxu0 0.0
  %223 = vmatpush1.msra.mxu0 0.0
  %224 = vmatprep.subr.mxu0 0.0
  %225 = vmatpush1.msra.mxu0 0.0
  %226 = vmatprep.subr.mxu0 0.0
  %227 = vmatpush1.msra.mxu0 0.0
  %228 = vmatprep.subr.mxu0 0.0
  %229 = vmatpush1.msra.mxu0 0.0
  %230 = vmatprep.subr.mxu0 0.0
  %231 = vmatpush1.msra.mxu0 0.0
  %232 = vmatprep.subr.mxu0 0.0
  %233 = vmatpush1.msra.mxu0 0.0
  %234 = vmatprep.subr.mxu0 0.0
  %235 = vmatpush1.msra.mxu0 0.0
  %236 = vmatprep.subr.mxu0 0.0
  %237 = vmatpush1.msra.mxu0 0.0
  %238 = vmatprep.subr.mxu0 0.0
  %239 = vmatpush1.msra.mxu0 0.0
  %240 = vmatprep.subr.mxu0 0.0
  %241 = vmatpush1.msra.mxu0 0.0
  %242 = vmatprep.subr.mxu0 0.0
  %243 = vmatpush1.msra.mxu0 0.0
  %244 = vmatprep.mubr.f32.mxu0 0.0
  %245 = vmatmul.mubr.f32.gmra.mrb[0].mxu0 %v91
  %v246 = vpop.f32.mrb[0].mxu0
  %v247 = vadd.f32 %v105, %v246
  %v248 = vpop.f32.mrb[0].mxu0
  %249 = vdwg.mxu0
  %v250 = vadd.f32 %v92, %v176
  %v251 = vxor.u32 %v250, 2147483648
  %v252 = vmul.f32 %v251, 1.442695
  %v253 = vpow.pop %v252
  %v254 = vadd.f32 %v253, 1.0
  %v255 = vrcp.pop %v254
  %v256 = vmul.f32 1.0, %v255
  %v258 = vrot.slane %v92, 2
  %v260 = vadd.f32 %v258, %v178
  %v261 = vxor.u32 %v260, 2147483648
  %v262 = vmul.f32 %v261, 1.442695
  %v263 = vpow.pop %v262
  %v264 = vadd.f32 %v263, 1.0
  %v265 = vrcp.pop %v264
  %v266 = vmul.f32 1.0, %v265
  %v267 = vmul.f32 %v256, %v247
  %v268 = vrot.slane %v92, 4
  %v270 = vadd.f32 %v268, %v267
  %v271 = vtanh.pop %v270
  %v272 = vsub.f32 1.0, %v266
  %v273 = vmul.f32 %v272, %v271
  %v274 = vmul.f32 %v266, %v91
  %v275 = vadd.f32 %v273, %v274
  %v277 = vlaneseq
  %v278 = vshrl.u32 %v277, 7
  %v279 = vsub.s32 0, %v278
  %v280 = vrot.slane %v90, %v279
  %282 = vmatprep.subr.mxu0 0.0
  %283 = vmatpush1.msra.mxu0 %v74
  %284 = vmatprep.subr.mxu0 0.0
  %285 = vmatpush1.msra.mxu0 %v75
  %286 = vmatprep.subr.mxu0 0.0
  %287 = vmatpush1.msra.mxu0 %v76
  %288 = vmatprep.subr.mxu0 0.0
  %289 = vmatpush1.msra.mxu0 %v77
  %290 = vmatprep.subr.mxu0 0.0
  %291 = vmatpush1.msra.mxu0 %v78
  %292 = vmatprep.subr.mxu0 0.0
  %293 = vmatpush1.msra.mxu0 %v79
  %294 = vmatprep.subr.mxu0 0.0
  %295 = vmatpush1.msra.mxu0 %v80
  %296 = vmatprep.subr.mxu0 0.0
  %297 = vmatpush1.msra.mxu0 %v81
  %298 = vmatprep.subr.mxu0 0.0
  %299 = vmatpush1.msra.mxu0 %v82
  %300 = vmatprep.subr.mxu0 0.0
  %301 = vmatpush1.msra.mxu0 %v83
  %302 = vmatprep.subr.mxu0 0.0
  %303 = vmatpush1.msra.mxu0 %v84
  %304 = vmatprep.subr.mxu0 0.0
  %305 = vmatpush1.msra.mxu0 %v85
  %306 = vmatprep.subr.mxu0 0.0
  %307 = vmatpush1.msra.mxu0 %v86
  %308 = vmatprep.subr.mxu0 0.0
  %309 = vmatpush1.msra.mxu0 %v87
  %310 = vmatprep.subr.mxu0 0.0
  %311 = vmatpush1.msra.mxu0 %v88
  %312 = vmatprep.subr.mxu0 0.0
  %313 = vmatpush1.msra.mxu0 %v89
  %314 = vmatprep.subr.mxu0 0.0
  %315 = vmatpush1.msra.mxu0 0.0
  %316 = vmatprep.subr.mxu0 0.0
  %317 = vmatpush1.msra.mxu0 0.0
  %318 = vmatprep.subr.mxu0 0.0
  %319 = vmatpush1.msra.mxu0 0.0
  %320 = vmatprep.subr.mxu0 0.0
  %321 = vmatpush1.msra.mxu0 0.0
  %322 = vmatprep.subr.mxu0 0.0
  %323 = vmatpush1.msra.mxu0 0.0
  %324 = vmatprep.subr.mxu0 0.0
  %325 = vmatpush1.msra.mxu0 0.0
  %326 = vmatprep.subr.mxu0 0.0
  %327 = vmatpush1.msra.mxu0 0.0
  %328 = vmatprep.subr.mxu0 0.0
  %329 = vmatpush1.msra.mxu0 0.0
  %330 = vmatprep.subr.mxu0 0.0
  %331 = vmatpush1.msra.mxu0 0.0
  %332 = vmatprep.subr.mxu0 0.0
  %333 = vmatpush1.msra.mxu0 0.0
  %334 = vmatprep.subr.mxu0 0.0
  %335 = vmatpush1.msra.mxu0 0.0
  %336 = vmatprep.subr.mxu0 0.0
  %337 = vmatpush1.msra.mxu0 0.0
  %338 = vmatprep.subr.mxu0 0.0
  %339 = vmatpush1.msra.mxu0 0.0
  %340 = vmatprep.subr.mxu0 0.0
  %341 = vmatpush1.msra.mxu0 0.0
  %342 = vmatprep.subr.mxu0 0.0
  %343 = vmatpush1.msra.mxu0 0.0
  %344 = vmatprep.subr.mxu0 0.0
  %345 = vmatpush1.msra.mxu0 0.0
  %346 = vmatprep.mubr.f32.mxu0 0.0
  %347 = vmatmul.mubr.f32.gmra.mrb[0].mxu0 %v275
  %v348 = vpop.f32.mrb[0].mxu0
  %v349 = vadd.f32 %v280, %v348
  %v350 = vpop.f32.mrb[0].mxu0
  %351 = vdwg.mxu0
  %352 = vst [vmem:[%s5] sm:$0x3] %v349
  %s353 = scalar_lea.vmem %s0, 6
  %v354 = vld [vmem:[%s353] sm:$0x3f]
  %355 = vmatprep.subr.mxu0 %v26
  %356 = vmatpush1.msra.mxu0 %v25
  %357 = vmatprep.subr.mxu0 %v29
  %358 = vmatpush1.msra.mxu0 %v28
  %359 = vmatprep.subr.mxu0 %v32
  %360 = vmatpush1.msra.mxu0 %v31
  %361 = vmatprep.subr.mxu0 %v35
  %362 = vmatpush1.msra.mxu0 %v34
  %363 = vmatprep.subr.mxu0 %v38
  %364 = vmatpush1.msra.mxu0 %v37
  %365 = vmatprep.subr.mxu0 %v41
  %366 = vmatpush1.msra.mxu0 %v40
  %367 = vmatprep.subr.mxu0 %v44
  %368 = vmatpush1.msra.mxu0 %v43
  %369 = vmatprep.subr.mxu0 %v47
  %370 = vmatpush1.msra.mxu0 %v46
  %371 = vmatprep.subr.mxu0 %v50
  %372 = vmatpush1.msra.mxu0 %v49
  %373 = vmatprep.subr.mxu0 %v53
  %374 = vmatpush1.msra.mxu0 %v52
  %375 = vmatprep.subr.mxu0 %v56
  %376 = vmatpush1.msra.mxu0 %v55
  %377 = vmatprep.subr.mxu0 %v59
  %378 = vmatpush1.msra.mxu0 %v58
  %379 = vmatprep.subr.mxu0 %v62
  %380 = vmatpush1.msra.mxu0 %v61
  %381 = vmatprep.subr.mxu0 %v65
  %382 = vmatpush1.msra.mxu0 %v64
  %383 = vmatprep.subr.mxu0 %v68
  %384 = vmatpush1.msra.mxu0 %v67
  %385 = vmatprep.subr.mxu0 %v71
  %386 = vmatpush1.msra.mxu0 %v70
  %387 = vmatprep.subr.mxu0 0.0
  %388 = vmatpush1.msra.mxu0 0.0
  %389 = vmatprep.subr.mxu0 0.0
  %390 = vmatpush1.msra.mxu0 0.0
  %391 = vmatprep.subr.mxu0 0.0
  %392 = vmatpush1.msra.mxu0 0.0
  %393 = vmatprep.subr.mxu0 0.0
  %394 = vmatpush1.msra.mxu0 0.0
  %395 = vmatprep.subr.mxu0 0.0
  %396 = vmatpush1.msra.mxu0 0.0
  %397 = vmatprep.subr.mxu0 0.0
  %398 = vmatpush1.msra.mxu0 0.0
  %399 = vmatprep.subr.mxu0 0.0
  %400 = vmatpush1.msra.mxu0 0.0
  %401 = vmatprep.subr.mxu0 0.0
  %402 = vmatpush1.msra.mxu0 0.0
  %403 = vmatprep.subr.mxu0 0.0
  %404 = vmatpush1.msra.mxu0 0.0
  %405 = vmatprep.subr.mxu0 0.0
  %406 = vmatpush1.msra.mxu0 0.0
  %407 = vmatprep.subr.mxu0 0.0
  %408 = vmatpush1.msra.mxu0 0.0
  %409 = vmatprep.subr.mxu0 0.0
  %410 = vmatpush1.msra.mxu0 0.0
  %411 = vmatprep.subr.mxu0 0.0
  %412 = vmatpush1.msra.mxu0 0.0
  %413 = vmatprep.subr.mxu0 0.0
  %414 = vmatpush1.msra.mxu0 0.0
  %415 = vmatprep.subr.mxu0 0.0
  %416 = vmatpush1.msra.mxu0 0.0
  %417 = vmatprep.subr.mxu0 0.0
  %418 = vmatpush1.msra.mxu0 0.0
  %419 = vmatprep.mubr.f32.mxu0 0.0
  %420 = vmatmul.mubr.f32.gmra.mrb[0].mxu0 %v275
  %v421 = vpop.f32.mrb[0].mxu0
  %v422 = vadd.f32 %v97, %v421
  %v423 = vpop.f32.mrb[0].mxu0
  %v424 = vadd.f32 %v101, %v423
  %425 = vdwg.mxu0
  %426 = vmatprep.subr.mxu0 0.0
  %427 = vmatpush1.msra.mxu0 %v27
  %428 = vmatprep.subr.mxu0 0.0
  %429 = vmatpush1.msra.mxu0 %v30
  %430 = vmatprep.subr.mxu0 0.0
  %431 = vmatpush1.msra.mxu0 %v33
  %432 = vmatprep.subr.mxu0 0.0
  %433 = vmatpush1.msra.mxu0 %v36
  %434 = vmatprep.subr.mxu0 0.0
  %435 = vmatpush1.msra.mxu0 %v39
  %436 = vmatprep.subr.mxu0 0.0
  %437 = vmatpush1.msra.mxu0 %v42
  %438 = vmatprep.subr.mxu0 0.0
  %439 = vmatpush1.msra.mxu0 %v45
  %440 = vmatprep.subr.mxu0 0.0
  %441 = vmatpush1.msra.mxu0 %v48
  %442 = vmatprep.subr.mxu0 0.0
  %443 = vmatpush1.msra.mxu0 %v51
  %444 = vmatprep.subr.mxu0 0.0
  %445 = vmatpush1.msra.mxu0 %v54
  %446 = vmatprep.subr.mxu0 0.0
  %447 = vmatpush1.msra.mxu0 %v57
  %448 = vmatprep.subr.mxu0 0.0
  %449 = vmatpush1.msra.mxu0 %v60
  %450 = vmatprep.subr.mxu0 0.0
  %451 = vmatpush1.msra.mxu0 %v63
  %452 = vmatprep.subr.mxu0 0.0
  %453 = vmatpush1.msra.mxu0 %v66
  %454 = vmatprep.subr.mxu0 0.0
  %455 = vmatpush1.msra.mxu0 %v69
  %456 = vmatprep.subr.mxu0 0.0
  %457 = vmatpush1.msra.mxu0 %v72
  %458 = vmatprep.subr.mxu0 0.0
  %459 = vmatpush1.msra.mxu0 0.0
  %460 = vmatprep.subr.mxu0 0.0
  %461 = vmatpush1.msra.mxu0 0.0
  %462 = vmatprep.subr.mxu0 0.0
  %463 = vmatpush1.msra.mxu0 0.0
  %464 = vmatprep.subr.mxu0 0.0
  %465 = vmatpush1.msra.mxu0 0.0
  %466 = vmatprep.subr.mxu0 0.0
  %467 = vmatpush1.msra.mxu0 0.0
  %468 = vmatprep.subr.mxu0 0.0
  %469 = vmatpush1.msra.mxu0 0.0
  %470 = vmatprep.subr.mxu0 0.0
  %471 = vmatpush1.msra.mxu0 0.0
  %472 = vmatprep.subr.mxu0 0.0
  %473 = vmatpush1.msra.mxu0 0.0
  %474 = vmatprep.subr.mxu0 0.0
  %475 = vmatpush1.msra.mxu0 0.0
  %476 = vmatprep.subr.mxu0 0.0
  %477 = vmatpush1.msra.mxu0 0.0
  %478 = vmatprep.subr.mxu0 0.0
  %479 = vmatpush1.msra.mxu0 0.0
  %480 = vmatprep.subr.mxu0 0.0
  %481 = vmatpush1.msra.mxu0 0.0
  %482 = vmatprep.subr.mxu0 0.0
  %483 = vmatpush1.msra.mxu0 0.0
  %484 = vmatprep.subr.mxu0 0.0
  %485 = vmatpush1.msra.mxu0 0.0
  %486 = vmatprep.subr.mxu0 0.0
  %487 = vmatpush1.msra.mxu0 0.0
  %488 = vmatprep.subr.mxu0 0.0
  %489 = vmatpush1.msra.mxu0 0.0
  %490 = vmatprep.mubr.f32.mxu0 0.0
  %491 = vmatmul.mubr.f32.gmra.mrb[0].mxu0 %v275
  %v492 = vpop.f32.mrb[0].mxu0
  %v493 = vadd.f32 %v105, %v492
  %v494 = vpop.f32.mrb[0].mxu0
  %495 = vdwg.mxu0
  %v496 = vadd.f32 %v354, %v422
  %v497 = vxor.u32 %v496, 2147483648
  %v498 = vmul.f32 %v497, 1.442695
  %v499 = vpow.pop %v498
  %v500 = vadd.f32 %v499, 1.0
  %v501 = vrcp.pop %v500
  %v502 = vmul.f32 1.0, %v501
  %v504 = vrot.slane %v354, 2
  %v506 = vadd.f32 %v504, %v424
  %v507 = vxor.u32 %v506, 2147483648
  %v508 = vmul.f32 %v507, 1.442695
  %v509 = vpow.pop %v508
  %v510 = vadd.f32 %v509, 1.0
  %v511 = vrcp.pop %v510
  %v512 = vmul.f32 1.0, %v511
  %v513 = vmul.f32 %v502, %v493
  %v514 = vrot.slane %v354, 4
  %v516 = vadd.f32 %v514, %v513
  %v517 = vtanh.pop %v516
  %v518 = vsub.f32 1.0, %v512
  %v519 = vmul.f32 %v518, %v517
  %v520 = vmul.f32 %v512, %v275
  %v521 = vadd.f32 %v519, %v520
  %522 = vmatprep.subr.mxu0 0.0
  %523 = vmatpush1.msra.mxu0 %v74
  %524 = vmatprep.subr.mxu0 0.0
  %525 = vmatpush1.msra.mxu0 %v75
  %526 = vmatprep.subr.mxu0 0.0
  %527 = vmatpush1.msra.mxu0 %v76
  %528 = vmatprep.subr.mxu0 0.0
  %529 = vmatpush1.msra.mxu0 %v77
  %530 = vmatprep.subr.mxu0 0.0
  %531 = vmatpush1.msra.mxu0 %v78
  %532 = vmatprep.subr.mxu0 0.0
  %533 = vmatpush1.msra.mxu0 %v79
  %534 = vmatprep.subr.mxu0 0.0
  %535 = vmatpush1.msra.mxu0 %v80
  %536 = vmatprep.subr.mxu0 0.0
  %537 = vmatpush1.msra.mxu0 %v81
  %538 = vmatprep.subr.mxu0 0.0
  %539 = vmatpush1.msra.mxu0 %v82
  %540 = vmatprep.subr.mxu0 0.0
  %541 = vmatpush1.msra.mxu0 %v83
  %542 = vmatprep.subr.mxu0 0.0
  %543 = vmatpush1.msra.mxu0 %v84
  %544 = vmatprep.subr.mxu0 0.0
  %545 = vmatpush1.msra.mxu0 %v85
  %546 = vmatprep.subr.mxu0 0.0
  %547 = vmatpush1.msra.mxu0 %v86
  %548 = vmatprep.subr.mxu0 0.0
  %549 = vmatpush1.msra.mxu0 %v87
  %550 = vmatprep.subr.mxu0 0.0
  %551 = vmatpush1.msra.mxu0 %v88
  %552 = vmatprep.subr.mxu0 0.0
  %553 = vmatpush1.msra.mxu0 %v89
  %554 = vmatprep.subr.mxu0 0.0
  %555 = vmatpush1.msra.mxu0 0.0
  %556 = vmatprep.subr.mxu0 0.0
  %557 = vmatpush1.msra.mxu0 0.0
  %558 = vmatprep.subr.mxu0 0.0
  %559 = vmatpush1.msra.mxu0 0.0
  %560 = vmatprep.subr.mxu0 0.0
  %561 = vmatpush1.msra.mxu0 0.0
  %562 = vmatprep.subr.mxu0 0.0
  %563 = vmatpush1.msra.mxu0 0.0
  %564 = vmatprep.subr.mxu0 0.0
  %565 = vmatpush1.msra.mxu0 0.0
  %566 = vmatprep.subr.mxu0 0.0
  %567 = vmatpush1.msra.mxu0 0.0
  %568 = vmatprep.subr.mxu0 0.0
  %569 = vmatpush1.msra.mxu0 0.0
  %570 = vmatprep.subr.mxu0 0.0
  %571 = vmatpush1.msra.mxu0 0.0
  %572 = vmatprep.subr.mxu0 0.0
  %573 = vmatpush1.msra.mxu0 0.0
  %574 = vmatprep.subr.mxu0 0.0
  %575 = vmatpush1.msra.mxu0 0.0
  %576 = vmatprep.subr.mxu0 0.0
  %577 = vmatpush1.msra.mxu0 0.0
  %578 = vmatprep.subr.mxu0 0.0
  %579 = vmatpush1.msra.mxu0 0.0
  %580 = vmatprep.subr.mxu0 0.0
  %581 = vmatpush1.msra.mxu0 0.0
  %582 = vmatprep.subr.mxu0 0.0
  %583 = vmatpush1.msra.mxu0 0.0
  %584 = vmatprep.subr.mxu0 0.0
  %585 = vmatpush1.msra.mxu0 0.0
  %586 = vmatprep.mubr.f32.mxu0 0.0
  %587 = vmatmul.mubr.f32.gmra.mrb[0].mxu0 %v521
  %v588 = vpop.f32.mrb[0].mxu0
  %v589 = vadd.f32 %v280, %v588
  %v590 = vpop.f32.mrb[0].mxu0
  %591 = vdwg.mxu0
  %s592 = scalar_lea.vmem %s5, 2
  %593 = vst [vmem:[%s592] sm:$0x3] %v589
  %s594 = scalar_lea.vmem %s0, 12
  %v595 = vld [vmem:[%s594] sm:$0x3f]
  %596 = vmatprep.subr.mxu0 %v26
  %597 = vmatpush1.msra.mxu0 %v25
  %598 = vmatprep.subr.mxu0 %v29
  %599 = vmatpush1.msra.mxu0 %v28
  %600 = vmatprep.subr.mxu0 %v32
  %601 = vmatpush1.msra.mxu0 %v31
  %602 = vmatprep.subr.mxu0 %v35
  %603 = vmatpush1.msra.mxu0 %v34
  %604 = vmatprep.subr.mxu0 %v38
  %605 = vmatpush1.msra.mxu0 %v37
  %606 = vmatprep.subr.mxu0 %v41
  %607 = vmatpush1.msra.mxu0 %v40
  %608 = vmatprep.subr.mxu0 %v44
  %609 = vmatpush1.msra.mxu0 %v43
  %610 = vmatprep.subr.mxu0 %v47
  %611 = vmatpush1.msra.mxu0 %v46
  %612 = vmatprep.subr.mxu0 %v50
  %613 = vmatpush1.msra.mxu0 %v49
  %614 = vmatprep.subr.mxu0 %v53
  %615 = vmatpush1.msra.mxu0 %v52
  %616 = vmatprep.subr.mxu0 %v56
  %617 = vmatpush1.msra.mxu0 %v55
  %618 = vmatprep.subr.mxu0 %v59
  %619 = vmatpush1.msra.mxu0 %v58
  %620 = vmatprep.subr.mxu0 %v62
  %621 = vmatpush1.msra.mxu0 %v61
  %622 = vmatprep.subr.mxu0 %v65
  %623 = vmatpush1.msra.mxu0 %v64
  %624 = vmatprep.subr.mxu0 %v68
  %625 = vmatpush1.msra.mxu0 %v67
  %626 = vmatprep.subr.mxu0 %v71
  %627 = vmatpush1.msra.mxu0 %v70
  %628 = vmatprep.subr.mxu0 0.0
  %629 = vmatpush1.msra.mxu0 0.0
  %630 = vmatprep.subr.mxu0 0.0
  %631 = vmatpush1.msra.mxu0 0.0
  %632 = vmatprep.subr.mxu0 0.0
  %633 = vmatpush1.msra.mxu0 0.0
  %634 = vmatprep.subr.mxu0 0.0
  %635 = vmatpush1.msra.mxu0 0.0
  %636 = vmatprep.subr.mxu0 0.0
  %637 = vmatpush1.msra.mxu0 0.0
  %638 = vmatprep.subr.mxu0 0.0
  %639 = vmatpush1.msra.mxu0 0.0
  %640 = vmatprep.subr.mxu0 0.0
  %641 = vmatpush1.msra.mxu0 0.0
  %642 = vmatprep.subr.mxu0 0.0
  %643 = vmatpush1.msra.mxu0 0.0
  %644 = vmatprep.subr.mxu0 0.0
  %645 = vmatpush1.msra.mxu0 0.0
  %646 = vmatprep.subr.mxu0 0.0
  %647 = vmatpush1.msra.mxu0 0.0
  %648 = vmatprep.subr.mxu0 0.0
  %649 = vmatpush1.msra.mxu0 0.0
  %650 = vmatprep.subr.mxu0 0.0
  %651 = vmatpush1.msra.mxu0 0.0
  %652 = vmatprep.subr.mxu0 0.0
  %653 = vmatpush1.msra.mxu0 0.0
  %654 = vmatprep.subr.mxu0 0.0
  %655 = vmatpush1.msra.mxu0 0.0
  %656 = vmatprep.subr.mxu0 0.0
  %657 = vmatpush1.msra.mxu0 0.0
  %658 = vmatprep.subr.mxu0 0.0
  %659 = vmatpush1.msra.mxu0 0.0
  %660 = vmatprep.mubr.f32.mxu0 0.0
  %661 = vmatmul.mubr.f32.gmra.mrb[0].mxu0 %v521
  %v662 = vpop.f32.mrb[0].mxu0
  %v663 = vadd.f32 %v97, %v662
  %v664 = vpop.f32.mrb[0].mxu0
  %v665 = vadd.f32 %v101, %v664
  %666 = vdwg.mxu0
  %667 = vmatprep.subr.mxu0 0.0
  %668 = vmatpush1.msra.mxu0 %v27
  %669 = vmatprep.subr.mxu0 0.0
  %670 = vmatpush1.msra.mxu0 %v30
  %671 = vmatprep.subr.mxu0 0.0
  %672 = vmatpush1.msra.mxu0 %v33
  %673 = vmatprep.subr.mxu0 0.0
  %674 = vmatpush1.msra.mxu0 %v36
  %675 = vmatprep.subr.mxu0 0.0
  %676 = vmatpush1.msra.mxu0 %v39
  %677 = vmatprep.subr.mxu0 0.0
  %678 = vmatpush1.msra.mxu0 %v42
  %679 = vmatprep.subr.mxu0 0.0
  %680 = vmatpush1.msra.mxu0 %v45
  %681 = vmatprep.subr.mxu0 0.0
  %682 = vmatpush1.msra.mxu0 %v48
  %683 = vmatprep.subr.mxu0 0.0
  %684 = vmatpush1.msra.mxu0 %v51
  %685 = vmatprep.subr.mxu0 0.0
  %686 = vmatpush1.msra.mxu0 %v54
  %687 = vmatprep.subr.mxu0 0.0
  %688 = vmatpush1.msra.mxu0 %v57
  %689 = vmatprep.subr.mxu0 0.0
  %690 = vmatpush1.msra.mxu0 %v60
  %691 = vmatprep.subr.mxu0 0.0
  %692 = vmatpush1.msra.mxu0 %v63
  %693 = vmatprep.subr.mxu0 0.0
  %694 = vmatpush1.msra.mxu0 %v66
  %695 = vmatprep.subr.mxu0 0.0
  %696 = vmatpush1.msra.mxu0 %v69
  %697 = vmatprep.subr.mxu0 0.0
  %698 = vmatpush1.msra.mxu0 %v72
  %699 = vmatprep.subr.mxu0 0.0
  %700 = vmatpush1.msra.mxu0 0.0
  %701 = vmatprep.subr.mxu0 0.0
  %702 = vmatpush1.msra.mxu0 0.0
  %703 = vmatprep.subr.mxu0 0.0
  %704 = vmatpush1.msra.mxu0 0.0
  %705 = vmatprep.subr.mxu0 0.0
  %706 = vmatpush1.msra.mxu0 0.0
  %707 = vmatprep.subr.mxu0 0.0
  %708 = vmatpush1.msra.mxu0 0.0
  %709 = vmatprep.subr.mxu0 0.0
  %710 = vmatpush1.msra.mxu0 0.0
  %711 = vmatprep.subr.mxu0 0.0
  %712 = vmatpush1.msra.mxu0 0.0
  %713 = vmatprep.subr.mxu0 0.0
  %714 = vmatpush1.msra.mxu0 0.0
  %715 = vmatprep.subr.mxu0 0.0
  %716 = vmatpush1.msra.mxu0 0.0
  %717 = vmatprep.subr.mxu0 0.0
  %718 = vmatpush1.msra.mxu0 0.0
  %719 = vmatprep.subr.mxu0 0.0
  %720 = vmatpush1.msra.mxu0 0.0
  %721 = vmatprep.subr.mxu0 0.0
  %722 = vmatpush1.msra.mxu0 0.0
  %723 = vmatprep.subr.mxu0 0.0
  %724 = vmatpush1.msra.mxu0 0.0
  %725 = vmatprep.subr.mxu0 0.0
  %726 = vmatpush1.msra.mxu0 0.0
  %727 = vmatprep.subr.mxu0 0.0
  %728 = vmatpush1.msra.mxu0 0.0
  %729 = vmatprep.subr.mxu0 0.0
  %730 = vmatpush1.msra.mxu0 0.0
  %731 = vmatprep.mubr.f32.mxu0 0.0
  %732 = vmatmul.mubr.f32.gmra.mrb[0].mxu0 %v521
  %v733 = vpop.f32.mrb[0].mxu0
  %v734 = vadd.f32 %v105, %v733
  %v735 = vpop.f32.mrb[0].mxu0
  %736 = vdwg.mxu0
  %v737 = vadd.f32 %v595, %v663
  %v738 = vxor.u32 %v737, 2147483648
  %v739 = vmul.f32 %v738, 1.442695
  %v740 = vpow.pop %v739
  %v741 = vadd.f32 %v740, 1.0
  %v742 = vrcp.pop %v741
  %v743 = vmul.f32 1.0, %v742
  %v745 = vrot.slane %v595, 2
  %v747 = vadd.f32 %v745, %v665
  %v748 = vxor.u32 %v747, 2147483648
  %v749 = vmul.f32 %v748, 1.442695
  %v750 = vpow.pop %v749
  %v751 = vadd.f32 %v750, 1.0
  %v752 = vrcp.pop %v751
  %v753 = vmul.f32 1.0, %v752
  %v754 = vmul.f32 %v743, %v734
  %v755 = vrot.slane %v595, 4
  %v757 = vadd.f32 %v755, %v754
  %v758 = vtanh.pop %v757
  %v759 = vsub.f32 1.0, %v753
  %v760 = vmul.f32 %v759, %v758
  %v761 = vmul.f32 %v753, %v521
  %v762 = vadd.f32 %v760, %v761
  %763 = vmatprep.subr.mxu0 0.0
  %764 = vmatpush1.msra.mxu0 %v74
  %765 = vmatprep.subr.mxu0 0.0
  %766 = vmatpush1.msra.mxu0 %v75
  %767 = vmatprep.subr.mxu0 0.0
  %768 = vmatpush1.msra.mxu0 %v76
  %769 = vmatprep.subr.mxu0 0.0
  %770 = vmatpush1.msra.mxu0 %v77
  %771 = vmatprep.subr.mxu0 0.0
  %772 = vmatpush1.msra.mxu0 %v78
  %773 = vmatprep.subr.mxu0 0.0
  %774 = vmatpush1.msra.mxu0 %v79
  %775 = vmatprep.subr.mxu0 0.0
  %776 = vmatpush1.msra.mxu0 %v80
  %777 = vmatprep.subr.mxu0 0.0
  %778 = vmatpush1.msra.mxu0 %v81
  %779 = vmatprep.subr.mxu0 0.0
  %780 = vmatpush1.msra.mxu0 %v82
  %781 = vmatprep.subr.mxu0 0.0
  %782 = vmatpush1.msra.mxu0 %v83
  %783 = vmatprep.subr.mxu0 0.0
  %784 = vmatpush1.msra.mxu0 %v84
  %785 = vmatprep.subr.mxu0 0.0
  %786 = vmatpush1.msra.mxu0 %v85
  %787 = vmatprep.subr.mxu0 0.0
  %788 = vmatpush1.msra.mxu0 %v86
  %789 = vmatprep.subr.mxu0 0.0
  %790 = vmatpush1.msra.mxu0 %v87
  %791 = vmatprep.subr.mxu0 0.0
  %792 = vmatpush1.msra.mxu0 %v88
  %793 = vmatprep.subr.mxu0 0.0
  %794 = vmatpush1.msra.mxu0 %v89
  %795 = vmatprep.subr.mxu0 0.0
  %796 = vmatpush1.msra.mxu0 0.0
  %797 = vmatprep.subr.mxu0 0.0
  %798 = vmatpush1.msra.mxu0 0.0
  %799 = vmatprep.subr.mxu0 0.0
  %800 = vmatpush1.msra.mxu0 0.0
  %801 = vmatprep.subr.mxu0 0.0
  %802 = vmatpush1.msra.mxu0 0.0
  %803 = vmatprep.subr.mxu0 0.0
  %804 = vmatpush1.msra.mxu0 0.0
  %805 = vmatprep.subr.mxu0 0.0
  %806 = vmatpush1.msra.mxu0 0.0
  %807 = vmatprep.subr.mxu0 0.0
  %808 = vmatpush1.msra.mxu0 0.0
  %809 = vmatprep.subr.mxu0 0.0
  %810 = vmatpush1.msra.mxu0 0.0
  %811 = vmatprep.subr.mxu0 0.0
  %812 = vmatpush1.msra.mxu0 0.0
  %813 = vmatprep.subr.mxu0 0.0
  %814 = vmatpush1.msra.mxu0 0.0
  %815 = vmatprep.subr.mxu0 0.0
  %816 = vmatpush1.msra.mxu0 0.0
  %817 = vmatprep.subr.mxu0 0.0
  %818 = vmatpush1.msra.mxu0 0.0
  %819 = vmatprep.subr.mxu0 0.0
  %820 = vmatpush1.msra.mxu0 0.0
  %821 = vmatprep.subr.mxu0 0.0
  %822 = vmatpush1.msra.mxu0 0.0
  %823 = vmatprep.subr.mxu0 0.0
  %824 = vmatpush1.msra.mxu0 0.0
  %825 = vmatprep.subr.mxu0 0.0
  %826 = vmatpush1.msra.mxu0 0.0
  %827 = vmatprep.mubr.f32.mxu0 0.0
  %828 = vmatmul.mubr.f32.gmra.mrb[0].mxu0 %v762
  %v829 = vpop.f32.mrb[0].mxu0
  %v830 = vadd.f32 %v280, %v829
  %v831 = vpop.f32.mrb[0].mxu0
  %832 = vdwg.mxu0
  %s833 = scalar_lea.vmem %s5, 4
  %834 = vst [vmem:[%s833] sm:$0x3] %v830
  %s835 = scalar_lea.vmem %s0, 18
  %v836 = vld [vmem:[%s835] sm:$0x3f]
  %837 = vmatprep.subr.mxu0 %v26
  %838 = vmatpush1.msra.mxu0 %v25
  %839 = vmatprep.subr.mxu0 %v29
  %840 = vmatpush1.msra.mxu0 %v28
  %841 = vmatprep.subr.mxu0 %v32
  %842 = vmatpush1.msra.mxu0 %v31
  %843 = vmatprep.subr.mxu0 %v35
  %844 = vmatpush1.msra.mxu0 %v34
  %845 = vmatprep.subr.mxu0 %v38
  %846 = vmatpush1.msra.mxu0 %v37
  %847 = vmatprep.subr.mxu0 %v41
  %848 = vmatpush1.msra.mxu0 %v40
  %849 = vmatprep.subr.mxu0 %v44
  %850 = vmatpush1.msra.mxu0 %v43
  %851 = vmatprep.subr.mxu0 %v47
  %852 = vmatpush1.msra.mxu0 %v46
  %853 = vmatprep.subr.mxu0 %v50
  %854 = vmatpush1.msra.mxu0 %v49
  %855 = vmatprep.subr.mxu0 %v53
  %856 = vmatpush1.msra.mxu0 %v52
  %857 = vmatprep.subr.mxu0 %v56
  %858 = vmatpush1.msra.mxu0 %v55
  %859 = vmatprep.subr.mxu0 %v59
  %860 = vmatpush1.msra.mxu0 %v58
  %861 = vmatprep.subr.mxu0 %v62
  %862 = vmatpush1.msra.mxu0 %v61
  %863 = vmatprep.subr.mxu0 %v65
  %864 = vmatpush1.msra.mxu0 %v64
  %865 = vmatprep.subr.mxu0 %v68
  %866 = vmatpush1.msra.mxu0 %v67
  %867 = vmatprep.subr.mxu0 %v71
  %868 = vmatpush1.msra.mxu0 %v70
  %869 = vmatprep.subr.mxu0 0.0
  %870 = vmatpush1.msra.mxu0 0.0
  %871 = vmatprep.subr.mxu0 0.0
  %872 = vmatpush1.msra.mxu0 0.0
  %873 = vmatprep.subr.mxu0 0.0
  %874 = vmatpush1.msra.mxu0 0.0
  %875 = vmatprep.subr.mxu0 0.0
  %876 = vmatpush1.msra.mxu0 0.0
  %877 = vmatprep.subr.mxu0 0.0
  %878 = vmatpush1.msra.mxu0 0.0
  %879 = vmatprep.subr.mxu0 0.0
  %880 = vmatpush1.msra.mxu0 0.0
  %881 = vmatprep.subr.mxu0 0.0
  %882 = vmatpush1.msra.mxu0 0.0
  %883 = vmatprep.subr.mxu0 0.0
  %884 = vmatpush1.msra.mxu0 0.0
  %885 = vmatprep.subr.mxu0 0.0
  %886 = vmatpush1.msra.mxu0 0.0
  %887 = vmatprep.subr.mxu0 0.0
  %888 = vmatpush1.msra.mxu0 0.0
  %889 = vmatprep.subr.mxu0 0.0
  %890 = vmatpush1.msra.mxu0 0.0
  %891 = vmatprep.subr.mxu0 0.0
  %892 = vmatpush1.msra.mxu0 0.0
  %893 = vmatprep.subr.mxu0 0.0
  %894 = vmatpush1.msra.mxu0 0.0
  %895 = vmatprep.subr.mxu0 0.0
  %896 = vmatpush1.msra.mxu0 0.0
  %897 = vmatprep.subr.mxu0 0.0
  %898 = vmatpush1.msra.mxu0 0.0
  %899 = vmatprep.subr.mxu0 0.0
  %900 = vmatpush1.msra.mxu0 0.0
  %901 = vmatprep.mubr.f32.mxu0 0.0
  %902 = vmatmul.mubr.f32.gmra.mrb[0].mxu0 %v762
  %v903 = vpop.f32.mrb[0].mxu0
  %v904 = vadd.f32 %v97, %v903
  %v905 = vpop.f32.mrb[0].mxu0
  %v906 = vadd.f32 %v101, %v905
  %907 = vdwg.mxu0
  %908 = vmatprep.subr.mxu0 0.0
  %909 = vmatpush1.msra.mxu0 %v27
  %910 = vmatprep.subr.mxu0 0.0
  %911 = vmatpush1.msra.mxu0 %v30
  %912 = vmatprep.subr.mxu0 0.0
  %913 = vmatpush1.msra.mxu0 %v33
  %914 = vmatprep.subr.mxu0 0.0
  %915 = vmatpush1.msra.mxu0 %v36
  %916 = vmatprep.subr.mxu0 0.0
  %917 = vmatpush1.msra.mxu0 %v39
  %918 = vmatprep.subr.mxu0 0.0
  %919 = vmatpush1.msra.mxu0 %v42
  %920 = vmatprep.subr.mxu0 0.0
  %921 = vmatpush1.msra.mxu0 %v45
  %922 = vmatprep.subr.mxu0 0.0
  %923 = vmatpush1.msra.mxu0 %v48
  %924 = vmatprep.subr.mxu0 0.0
  %925 = vmatpush1.msra.mxu0 %v51
  %926 = vmatprep.subr.mxu0 0.0
  %927 = vmatpush1.msra.mxu0 %v54
  %928 = vmatprep.subr.mxu0 0.0
  %929 = vmatpush1.msra.mxu0 %v57
  %930 = vmatprep.subr.mxu0 0.0
  %931 = vmatpush1.msra.mxu0 %v60
  %932 = vmatprep.subr.mxu0 0.0
  %933 = vmatpush1.msra.mxu0 %v63
  %934 = vmatprep.subr.mxu0 0.0
  %935 = vmatpush1.msra.mxu0 %v66
  %936 = vmatprep.subr.mxu0 0.0
  %937 = vmatpush1.msra.mxu0 %v69
  %938 = vmatprep.subr.mxu0 0.0
  %939 = vmatpush1.msra.mxu0 %v72
  %940 = vmatprep.subr.mxu0 0.0
  %941 = vmatpush1.msra.mxu0 0.0
  %942 = vmatprep.subr.mxu0 0.0
  %943 = vmatpush1.msra.mxu0 0.0
  %944 = vmatprep.subr.mxu0 0.0
  %945 = vmatpush1.msra.mxu0 0.0
  %946 = vmatprep.subr.mxu0 0.0
  %947 = vmatpush1.msra.mxu0 0.0
  %948 = vmatprep.subr.mxu0 0.0
  %949 = vmatpush1.msra.mxu0 0.0
  %950 = vmatprep.subr.mxu0 0.0
  %951 = vmatpush1.msra.mxu0 0.0
  %952 = vmatprep.subr.mxu0 0.0
  %953 = vmatpush1.msra.mxu0 0.0
  %954 = vmatprep.subr.mxu0 0.0
  %955 = vmatpush1.msra.mxu0 0.0
  %956 = vmatprep.subr.mxu0 0.0
  %957 = vmatpush1.msra.mxu0 0.0
  %958 = vmatprep.subr.mxu0 0.0
  %959 = vmatpush1.msra.mxu0 0.0
  %960 = vmatprep.subr.mxu0 0.0
  %961 = vmatpush1.msra.mxu0 0.0
  %962 = vmatprep.subr.mxu0 0.0
  %963 = vmatpush1.msra.mxu0 0.0
  %964 = vmatprep.subr.mxu0 0.0
  %965 = vmatpush1.msra.mxu0 0.0
  %966 = vmatprep.subr.mxu0 0.0
  %967 = vmatpush1.msra.mxu0 0.0
  %968 = vmatprep.subr.mxu0 0.0
  %969 = vmatpush1.msra.mxu0 0.0
  %970 = vmatprep.subr.mxu0 0.0
  %971 = vmatpush1.msra.mxu0 0.0
  %972 = vmatprep.mubr.f32.mxu0 0.0
  %973 = vmatmul.mubr.f32.gmra.mrb[0].mxu0 %v762
  %v974 = vpop.f32.mrb[0].mxu0
  %v975 = vadd.f32 %v105, %v974
  %v976 = vpop.f32.mrb[0].mxu0
  %977 = vdwg.mxu0
  %v978 = vadd.f32 %v836, %v904
  %v979 = vxor.u32 %v978, 2147483648
  %v980 = vmul.f32 %v979, 1.442695
  %v981 = vpow.pop %v980
  %v982 = vadd.f32 %v981, 1.0
  %v983 = vrcp.pop %v982
  %v984 = vmul.f32 1.0, %v983
  %v986 = vrot.slane %v836, 2
  %v988 = vadd.f32 %v986, %v906
  %v989 = vxor.u32 %v988, 2147483648
  %v990 = vmul.f32 %v989, 1.442695
  %v991 = vpow.pop %v990
  %v992 = vadd.f32 %v991, 1.0
  %v993 = vrcp.pop %v992
  %v994 = vmul.f32 1.0, %v993
  %v995 = vmul.f32 %v984, %v975
  %v996 = vrot.slane %v836, 4
  %v998 = vadd.f32 %v996, %v995
  %v999 = vtanh.pop %v998
  %v1000 = vsub.f32 1.0, %v994
  %v1001 = vmul.f32 %v1000, %v999
  %v1002 = vmul.f32 %v994, %v762
  %v1003 = vadd.f32 %v1001, %v1002
  %1004 = vmatprep.subr.mxu0 0.0
  %1005 = vmatpush1.msra.mxu0 %v74
  %1006 = vmatprep.subr.mxu0 0.0
  %1007 = vmatpush1.msra.mxu0 %v75
  %1008 = vmatprep.subr.mxu0 0.0
  %1009 = vmatpush1.msra.mxu0 %v76
  %1010 = vmatprep.subr.mxu0 0.0
  %1011 = vmatpush1.msra.mxu0 %v77
  %1012 = vmatprep.subr.mxu0 0.0
  %1013 = vmatpush1.msra.mxu0 %v78
  %1014 = vmatprep.subr.mxu0 0.0
  %1015 = vmatpush1.msra.mxu0 %v79
  %1016 = vmatprep.subr.mxu0 0.0
  %1017 = vmatpush1.msra.mxu0 %v80
  %1018 = vmatprep.subr.mxu0 0.0
  %1019 = vmatpush1.msra.mxu0 %v81
  %1020 = vmatprep.subr.mxu0 0.0
  %1021 = vmatpush1.msra.mxu0 %v82
  %1022 = vmatprep.subr.mxu0 0.0
  %1023 = vmatpush1.msra.mxu0 %v83
  %1024 = vmatprep.subr.mxu0 0.0
  %1025 = vmatpush1.msra.mxu0 %v84
  %1026 = vmatprep.subr.mxu0 0.0
  %1027 = vmatpush1.msra.mxu0 %v85
  %1028 = vmatprep.subr.mxu0 0.0
  %1029 = vmatpush1.msra.mxu0 %v86
  %1030 = vmatprep.subr.mxu0 0.0
  %1031 = vmatpush1.msra.mxu0 %v87
  %1032 = vmatprep.subr.mxu0 0.0
  %1033 = vmatpush1.msra.mxu0 %v88
  %1034 = vmatprep.subr.mxu0 0.0
  %1035 = vmatpush1.msra.mxu0 %v89
  %1036 = vmatprep.subr.mxu0 0.0
  %1037 = vmatpush1.msra.mxu0 0.0
  %1038 = vmatprep.subr.mxu0 0.0
  %1039 = vmatpush1.msra.mxu0 0.0
  %1040 = vmatprep.subr.mxu0 0.0
  %1041 = vmatpush1.msra.mxu0 0.0
  %1042 = vmatprep.subr.mxu0 0.0
  %1043 = vmatpush1.msra.mxu0 0.0
  %1044 = vmatprep.subr.mxu0 0.0
  %1045 = vmatpush1.msra.mxu0 0.0
  %1046 = vmatprep.subr.mxu0 0.0
  %1047 = vmatpush1.msra.mxu0 0.0
  %1048 = vmatprep.subr.mxu0 0.0
  %1049 = vmatpush1.msra.mxu0 0.0
  %1050 = vmatprep.subr.mxu0 0.0
  %1051 = vmatpush1.msra.mxu0 0.0
  %1052 = vmatprep.subr.mxu0 0.0
  %1053 = vmatpush1.msra.mxu0 0.0
  %1054 = vmatprep.subr.mxu0 0.0
  %1055 = vmatpush1.msra.mxu0 0.0
  %1056 = vmatprep.subr.mxu0 0.0
  %1057 = vmatpush1.msra.mxu0 0.0
  %1058 = vmatprep.subr.mxu0 0.0
  %1059 = vmatpush1.msra.mxu0 0.0
  %1060 = vmatprep.subr.mxu0 0.0
  %1061 = vmatpush1.msra.mxu0 0.0
  %1062 = vmatprep.subr.mxu0 0.0
  %1063 = vmatpush1.msra.mxu0 0.0
  %1064 = vmatprep.subr.mxu0 0.0
  %1065 = vmatpush1.msra.mxu0 0.0
  %1066 = vmatprep.subr.mxu0 0.0
  %1067 = vmatpush1.msra.mxu0 0.0
  %1068 = vmatprep.mubr.f32.mxu0 0.0
  %1069 = vmatmul.mubr.f32.gmra.mrb[0].mxu0 %v1003
  %v1070 = vpop.f32.mrb[0].mxu0
  %v1071 = vadd.f32 %v280, %v1070
  %v1072 = vpop.f32.mrb[0].mxu0
  %1073 = vdwg.mxu0
  %s1074 = scalar_lea.vmem %s5, 6
  %1075 = vst [vmem:[%s1074] sm:$0x3] %v1071
  %s1076 = scalar_lea.vmem %s0, 24
  %v1077 = vld [vmem:[%s1076] sm:$0x3f]
  %1078 = vmatprep.subr.mxu0 %v26
  %1079 = vmatpush1.msra.mxu0 %v25
  %1080 = vmatprep.subr.mxu0 %v29
  %1081 = vmatpush1.msra.mxu0 %v28
  %1082 = vmatprep.subr.mxu0 %v32
  %1083 = vmatpush1.msra.mxu0 %v31
  %1084 = vmatprep.subr.mxu0 %v35
  %1085 = vmatpush1.msra.mxu0 %v34
  %1086 = vmatprep.subr.mxu0 %v38
  %1087 = vmatpush1.msra.mxu0 %v37
  %1088 = vmatprep.subr.mxu0 %v41
  %1089 = vmatpush1.msra.mxu0 %v40
  %1090 = vmatprep.subr.mxu0 %v44
  %1091 = vmatpush1.msra.mxu0 %v43
  %1092 = vmatprep.subr.mxu0 %v47
  %1093 = vmatpush1.msra.mxu0 %v46
  %1094 = vmatprep.subr.mxu0 %v50
  %1095 = vmatpush1.msra.mxu0 %v49
  %1096 = vmatprep.subr.mxu0 %v53
  %1097 = vmatpush1.msra.mxu0 %v52
  %1098 = vmatprep.subr.mxu0 %v56
  %1099 = vmatpush1.msra.mxu0 %v55
  %1100 = vmatprep.subr.mxu0 %v59
  %1101 = vmatpush1.msra.mxu0 %v58
  %1102 = vmatprep.subr.mxu0 %v62
  %1103 = vmatpush1.msra.mxu0 %v61
  %1104 = vmatprep.subr.mxu0 %v65
  %1105 = vmatpush1.msra.mxu0 %v64
  %1106 = vmatprep.subr.mxu0 %v68
  %1107 = vmatpush1.msra.mxu0 %v67
  %1108 = vmatprep.subr.mxu0 %v71
  %1109 = vmatpush1.msra.mxu0 %v70
  %1110 = vmatprep.subr.mxu0 0.0
  %1111 = vmatpush1.msra.mxu0 0.0
  %1112 = vmatprep.subr.mxu0 0.0
  %1113 = vmatpush1.msra.mxu0 0.0
  %1114 = vmatprep.subr.mxu0 0.0
  %1115 = vmatpush1.msra.mxu0 0.0
  %1116 = vmatprep.subr.mxu0 0.0
  %1117 = vmatpush1.msra.mxu0 0.0
  %1118 = vmatprep.subr.mxu0 0.0
  %1119 = vmatpush1.msra.mxu0 0.0
  %1120 = vmatprep.subr.mxu0 0.0
  %1121 = vmatpush1.msra.mxu0 0.0
  %1122 = vmatprep.subr.mxu0 0.0
  %1123 = vmatpush1.msra.mxu0 0.0
  %1124 = vmatprep.subr.mxu0 0.0
  %1125 = vmatpush1.msra.mxu0 0.0
  %1126 = vmatprep.subr.mxu0 0.0
  %1127 = vmatpush1.msra.mxu0 0.0
  %1128 = vmatprep.subr.mxu0 0.0
  %1129 = vmatpush1.msra.mxu0 0.0
  %1130 = vmatprep.subr.mxu0 0.0
  %1131 = vmatpush1.msra.mxu0 0.0
  %1132 = vmatprep.subr.mxu0 0.0
  %1133 = vmatpush1.msra.mxu0 0.0
  %1134 = vmatprep.subr.mxu0 0.0
  %1135 = vmatpush1.msra.mxu0 0.0
  %1136 = vmatprep.subr.mxu0 0.0
  %1137 = vmatpush1.msra.mxu0 0.0
  %1138 = vmatprep.subr.mxu0 0.0
  %1139 = vmatpush1.msra.mxu0 0.0
  %1140 = vmatprep.subr.mxu0 0.0
  %1141 = vmatpush1.msra.mxu0 0.0
  %1142 = vmatprep.mubr.f32.mxu0 0.0
  %1143 = vmatmul.mubr.f32.gmra.mrb[0].mxu0 %v1003
  %v1144 = vpop.f32.mrb[0].mxu0
  %v1145 = vadd.f32 %v97, %v1144
  %v1146 = vpop.f32.mrb[0].mxu0
  %v1147 = vadd.f32 %v101, %v1146
  %1148 = vdwg.mxu0
  %1149 = vmatprep.subr.mxu0 0.0
  %1150 = vmatpush1.msra.mxu0 %v27
  %1151 = vmatprep.subr.mxu0 0.0
  %1152 = vmatpush1.msra.mxu0 %v30
  %1153 = vmatprep.subr.mxu0 0.0
  %1154 = vmatpush1.msra.mxu0 %v33
  %1155 = vmatprep.subr.mxu0 0.0
  %1156 = vmatpush1.msra.mxu0 %v36
  %1157 = vmatprep.subr.mxu0 0.0
  %1158 = vmatpush1.msra.mxu0 %v39
  %1159 = vmatprep.subr.mxu0 0.0
  %1160 = vmatpush1.msra.mxu0 %v42
  %1161 = vmatprep.subr.mxu0 0.0
  %1162 = vmatpush1.msra.mxu0 %v45
  %1163 = vmatprep.subr.mxu0 0.0
  %1164 = vmatpush1.msra.mxu0 %v48
  %1165 = vmatprep.subr.mxu0 0.0
  %1166 = vmatpush1.msra.mxu0 %v51
  %1167 = vmatprep.subr.mxu0 0.0
  %1168 = vmatpush1.msra.mxu0 %v54
  %1169 = vmatprep.subr.mxu0 0.0
  %1170 = vmatpush1.msra.mxu0 %v57
  %1171 = vmatprep.subr.mxu0 0.0
  %1172 = vmatpush1.msra.mxu0 %v60
  %1173 = vmatprep.subr.mxu0 0.0
  %1174 = vmatpush1.msra.mxu0 %v63
  %1175 = vmatprep.subr.mxu0 0.0
  %1176 = vmatpush1.msra.mxu0 %v66
  %1177 = vmatprep.subr.mxu0 0.0
  %1178 = vmatpush1.msra.mxu0 %v69
  %1179 = vmatprep.subr.mxu0 0.0
  %1180 = vmatpush1.msra.mxu0 %v72
  %1181 = vmatprep.subr.mxu0 0.0
  %1182 = vmatpush1.msra.mxu0 0.0
  %1183 = vmatprep.subr.mxu0 0.0
  %1184 = vmatpush1.msra.mxu0 0.0
  %1185 = vmatprep.subr.mxu0 0.0
  %1186 = vmatpush1.msra.mxu0 0.0
  %1187 = vmatprep.subr.mxu0 0.0
  %1188 = vmatpush1.msra.mxu0 0.0
  %1189 = vmatprep.subr.mxu0 0.0
  %1190 = vmatpush1.msra.mxu0 0.0
  %1191 = vmatprep.subr.mxu0 0.0
  %1192 = vmatpush1.msra.mxu0 0.0
  %1193 = vmatprep.subr.mxu0 0.0
  %1194 = vmatpush1.msra.mxu0 0.0
  %1195 = vmatprep.subr.mxu0 0.0
  %1196 = vmatpush1.msra.mxu0 0.0
  %1197 = vmatprep.subr.mxu0 0.0
  %1198 = vmatpush1.msra.mxu0 0.0
  %1199 = vmatprep.subr.mxu0 0.0
  %1200 = vmatpush1.msra.mxu0 0.0
  %1201 = vmatprep.subr.mxu0 0.0
  %1202 = vmatpush1.msra.mxu0 0.0
  %1203 = vmatprep.subr.mxu0 0.0
  %1204 = vmatpush1.msra.mxu0 0.0
  %1205 = vmatprep.subr.mxu0 0.0
  %1206 = vmatpush1.msra.mxu0 0.0
  %1207 = vmatprep.subr.mxu0 0.0
  %1208 = vmatpush1.msra.mxu0 0.0
  %1209 = vmatprep.subr.mxu0 0.0
  %1210 = vmatpush1.msra.mxu0 0.0
  %1211 = vmatprep.subr.mxu0 0.0
  %1212 = vmatpush1.msra.mxu0 0.0
  %1213 = vmatprep.mubr.f32.mxu0 0.0
  %1214 = vmatmul.mubr.f32.gmra.mrb[0].mxu0 %v1003
  %v1215 = vpop.f32.mrb[0].mxu0
  %v1216 = vadd.f32 %v105, %v1215
  %v1217 = vpop.f32.mrb[0].mxu0
  %1218 = vdwg.mxu0
  %v1219 = vadd.f32 %v1077, %v1145
  %v1220 = vxor.u32 %v1219, 2147483648
  %v1221 = vmul.f32 %v1220, 1.442695
  %v1222 = vpow.pop %v1221
  %v1223 = vadd.f32 %v1222, 1.0
  %v1224 = vrcp.pop %v1223
  %v1225 = vmul.f32 1.0, %v1224
  %v1227 = vrot.slane %v1077, 2
  %v1229 = vadd.f32 %v1227, %v1147
  %v1230 = vxor.u32 %v1229, 2147483648
  %v1231 = vmul.f32 %v1230, 1.442695
  %v1232 = vpow.pop %v1231
  %v1233 = vadd.f32 %v1232, 1.0
  %v1234 = vrcp.pop %v1233
  %v1235 = vmul.f32 1.0, %v1234
  %v1236 = vmul.f32 %v1225, %v1216
  %v1237 = vrot.slane %v1077, 4
  %v1239 = vadd.f32 %v1237, %v1236
  %v1240 = vtanh.pop %v1239
  %v1241 = vsub.f32 1.0, %v1235
  %v1242 = vmul.f32 %v1241, %v1240
  %v1243 = vmul.f32 %v1235, %v1003
  %v1244 = vadd.f32 %v1242, %v1243
  %1245 = vmatprep.subr.mxu0 0.0
  %1246 = vmatpush1.msra.mxu0 %v74
  %1247 = vmatprep.subr.mxu0 0.0
  %1248 = vmatpush1.msra.mxu0 %v75
  %1249 = vmatprep.subr.mxu0 0.0
  %1250 = vmatpush1.msra.mxu0 %v76
  %1251 = vmatprep.subr.mxu0 0.0
  %1252 = vmatpush1.msra.mxu0 %v77
  %1253 = vmatprep.subr.mxu0 0.0
  %1254 = vmatpush1.msra.mxu0 %v78
  %1255 = vmatprep.subr.mxu0 0.0
  %1256 = vmatpush1.msra.mxu0 %v79
  %1257 = vmatprep.subr.mxu0 0.0
  %1258 = vmatpush1.msra.mxu0 %v80
  %1259 = vmatprep.subr.mxu0 0.0
  %1260 = vmatpush1.msra.mxu0 %v81
  %1261 = vmatprep.subr.mxu0 0.0
  %1262 = vmatpush1.msra.mxu0 %v82
  %1263 = vmatprep.subr.mxu0 0.0
  %1264 = vmatpush1.msra.mxu0 %v83
  %1265 = vmatprep.subr.mxu0 0.0
  %1266 = vmatpush1.msra.mxu0 %v84
  %1267 = vmatprep.subr.mxu0 0.0
  %1268 = vmatpush1.msra.mxu0 %v85
  %1269 = vmatprep.subr.mxu0 0.0
  %1270 = vmatpush1.msra.mxu0 %v86
  %1271 = vmatprep.subr.mxu0 0.0
  %1272 = vmatpush1.msra.mxu0 %v87
  %1273 = vmatprep.subr.mxu0 0.0
  %1274 = vmatpush1.msra.mxu0 %v88
  %1275 = vmatprep.subr.mxu0 0.0
  %1276 = vmatpush1.msra.mxu0 %v89
  %1277 = vmatprep.subr.mxu0 0.0
  %1278 = vmatpush1.msra.mxu0 0.0
  %1279 = vmatprep.subr.mxu0 0.0
  %1280 = vmatpush1.msra.mxu0 0.0
  %1281 = vmatprep.subr.mxu0 0.0
  %1282 = vmatpush1.msra.mxu0 0.0
  %1283 = vmatprep.subr.mxu0 0.0
  %1284 = vmatpush1.msra.mxu0 0.0
  %1285 = vmatprep.subr.mxu0 0.0
  %1286 = vmatpush1.msra.mxu0 0.0
  %1287 = vmatprep.subr.mxu0 0.0
  %1288 = vmatpush1.msra.mxu0 0.0
  %1289 = vmatprep.subr.mxu0 0.0
  %1290 = vmatpush1.msra.mxu0 0.0
  %1291 = vmatprep.subr.mxu0 0.0
  %1292 = vmatpush1.msra.mxu0 0.0
  %1293 = vmatprep.subr.mxu0 0.0
  %1294 = vmatpush1.msra.mxu0 0.0
  %1295 = vmatprep.subr.mxu0 0.0
  %1296 = vmatpush1.msra.mxu0 0.0
  %1297 = vmatprep.subr.mxu0 0.0
  %1298 = vmatpush1.msra.mxu0 0.0
  %1299 = vmatprep.subr.mxu0 0.0
  %1300 = vmatpush1.msra.mxu0 0.0
  %1301 = vmatprep.subr.mxu0 0.0
  %1302 = vmatpush1.msra.mxu0 0.0
  %1303 = vmatprep.subr.mxu0 0.0
  %1304 = vmatpush1.msra.mxu0 0.0
  %1305 = vmatprep.subr.mxu0 0.0
  %1306 = vmatpush1.msra.mxu0 0.0
  %1307 = vmatprep.subr.mxu0 0.0
  %1308 = vmatpush1.msra.mxu0 0.0
  %1309 = vmatprep.mubr.f32.mxu0 0.0
  %1310 = vmatmul.mubr.f32.gmra.mrb[0].mxu0 %v1244
  %v1311 = vpop.f32.mrb[0].mxu0
  %v1312 = vadd.f32 %v280, %v1311
  %v1313 = vpop.f32.mrb[0].mxu0
  %1314 = vdwg.mxu0
  %s1315 = scalar_lea.vmem %s5, 8
  %1316 = vst [vmem:[%s1315] sm:$0x3] %v1312
  %s1317 = scalar_lea.vmem %s0, 30
  %v1318 = vld [vmem:[%s1317] sm:$0x3f]
  %1319 = vmatprep.subr.mxu0 %v26
  %1320 = vmatpush1.msra.mxu0 %v25
  %1321 = vmatprep.subr.mxu0 %v29
  %1322 = vmatpush1.msra.mxu0 %v28
  %1323 = vmatprep.subr.mxu0 %v32
  %1324 = vmatpush1.msra.mxu0 %v31
  %1325 = vmatprep.subr.mxu0 %v35
  %1326 = vmatpush1.msra.mxu0 %v34
  %1327 = vmatprep.subr.mxu0 %v38
  %1328 = vmatpush1.msra.mxu0 %v37
  %1329 = vmatprep.subr.mxu0 %v41
  %1330 = vmatpush1.msra.mxu0 %v40
  %1331 = vmatprep.subr.mxu0 %v44
  %1332 = vmatpush1.msra.mxu0 %v43
  %1333 = vmatprep.subr.mxu0 %v47
  %1334 = vmatpush1.msra.mxu0 %v46
  %1335 = vmatprep.subr.mxu0 %v50
  %1336 = vmatpush1.msra.mxu0 %v49
  %1337 = vmatprep.subr.mxu0 %v53
  %1338 = vmatpush1.msra.mxu0 %v52
  %1339 = vmatprep.subr.mxu0 %v56
  %1340 = vmatpush1.msra.mxu0 %v55
  %1341 = vmatprep.subr.mxu0 %v59
  %1342 = vmatpush1.msra.mxu0 %v58
  %1343 = vmatprep.subr.mxu0 %v62
  %1344 = vmatpush1.msra.mxu0 %v61
  %1345 = vmatprep.subr.mxu0 %v65
  %1346 = vmatpush1.msra.mxu0 %v64
  %1347 = vmatprep.subr.mxu0 %v68
  %1348 = vmatpush1.msra.mxu0 %v67
  %1349 = vmatprep.subr.mxu0 %v71
  %1350 = vmatpush1.msra.mxu0 %v70
  %1351 = vmatprep.subr.mxu0 0.0
  %1352 = vmatpush1.msra.mxu0 0.0
  %1353 = vmatprep.subr.mxu0 0.0
  %1354 = vmatpush1.msra.mxu0 0.0
  %1355 = vmatprep.subr.mxu0 0.0
  %1356 = vmatpush1.msra.mxu0 0.0
  %1357 = vmatprep.subr.mxu0 0.0
  %1358 = vmatpush1.msra.mxu0 0.0
  %1359 = vmatprep.subr.mxu0 0.0
  %1360 = vmatpush1.msra.mxu0 0.0
  %1361 = vmatprep.subr.mxu0 0.0
  %1362 = vmatpush1.msra.mxu0 0.0
  %1363 = vmatprep.subr.mxu0 0.0
  %1364 = vmatpush1.msra.mxu0 0.0
  %1365 = vmatprep.subr.mxu0 0.0
  %1366 = vmatpush1.msra.mxu0 0.0
  %1367 = vmatprep.subr.mxu0 0.0
  %1368 = vmatpush1.msra.mxu0 0.0
  %1369 = vmatprep.subr.mxu0 0.0
  %1370 = vmatpush1.msra.mxu0 0.0
  %1371 = vmatprep.subr.mxu0 0.0
  %1372 = vmatpush1.msra.mxu0 0.0
  %1373 = vmatprep.subr.mxu0 0.0
  %1374 = vmatpush1.msra.mxu0 0.0
  %1375 = vmatprep.subr.mxu0 0.0
  %1376 = vmatpush1.msra.mxu0 0.0
  %1377 = vmatprep.subr.mxu0 0.0
  %1378 = vmatpush1.msra.mxu0 0.0
  %1379 = vmatprep.subr.mxu0 0.0
  %1380 = vmatpush1.msra.mxu0 0.0
  %1381 = vmatprep.subr.mxu0 0.0
  %1382 = vmatpush1.msra.mxu0 0.0
  %1383 = vmatprep.mubr.f32.mxu0 0.0
  %1384 = vmatmul.mubr.f32.gmra.mrb[0].mxu0 %v1244
  %v1385 = vpop.f32.mrb[0].mxu0
  %v1386 = vadd.f32 %v97, %v1385
  %v1387 = vpop.f32.mrb[0].mxu0
  %v1388 = vadd.f32 %v101, %v1387
  %1389 = vdwg.mxu0
  %1390 = vmatprep.subr.mxu0 0.0
  %1391 = vmatpush1.msra.mxu0 %v27
  %1392 = vmatprep.subr.mxu0 0.0
  %1393 = vmatpush1.msra.mxu0 %v30
  %1394 = vmatprep.subr.mxu0 0.0
  %1395 = vmatpush1.msra.mxu0 %v33
  %1396 = vmatprep.subr.mxu0 0.0
  %1397 = vmatpush1.msra.mxu0 %v36
  %1398 = vmatprep.subr.mxu0 0.0
  %1399 = vmatpush1.msra.mxu0 %v39
  %1400 = vmatprep.subr.mxu0 0.0
  %1401 = vmatpush1.msra.mxu0 %v42
  %1402 = vmatprep.subr.mxu0 0.0
  %1403 = vmatpush1.msra.mxu0 %v45
  %1404 = vmatprep.subr.mxu0 0.0
  %1405 = vmatpush1.msra.mxu0 %v48
  %1406 = vmatprep.subr.mxu0 0.0
  %1407 = vmatpush1.msra.mxu0 %v51
  %1408 = vmatprep.subr.mxu0 0.0
  %1409 = vmatpush1.msra.mxu0 %v54
  %1410 = vmatprep.subr.mxu0 0.0
  %1411 = vmatpush1.msra.mxu0 %v57
  %1412 = vmatprep.subr.mxu0 0.0
  %1413 = vmatpush1.msra.mxu0 %v60
  %1414 = vmatprep.subr.mxu0 0.0
  %1415 = vmatpush1.msra.mxu0 %v63
  %1416 = vmatprep.subr.mxu0 0.0
  %1417 = vmatpush1.msra.mxu0 %v66
  %1418 = vmatprep.subr.mxu0 0.0
  %1419 = vmatpush1.msra.mxu0 %v69
  %1420 = vmatprep.subr.mxu0 0.0
  %1421 = vmatpush1.msra.mxu0 %v72
  %1422 = vmatprep.subr.mxu0 0.0
  %1423 = vmatpush1.msra.mxu0 0.0
  %1424 = vmatprep.subr.mxu0 0.0
  %1425 = vmatpush1.msra.mxu0 0.0
  %1426 = vmatprep.subr.mxu0 0.0
  %1427 = vmatpush1.msra.mxu0 0.0
  %1428 = vmatprep.subr.mxu0 0.0
  %1429 = vmatpush1.msra.mxu0 0.0
  %1430 = vmatprep.subr.mxu0 0.0
  %1431 = vmatpush1.msra.mxu0 0.0
  %1432 = vmatprep.subr.mxu0 0.0
  %1433 = vmatpush1.msra.mxu0 0.0
  %1434 = vmatprep.subr.mxu0 0.0
  %1435 = vmatpush1.msra.mxu0 0.0
  %1436 = vmatprep.subr.mxu0 0.0
  %1437 = vmatpush1.msra.mxu0 0.0
  %1438 = vmatprep.subr.mxu0 0.0
  %1439 = vmatpush1.msra.mxu0 0.0
  %1440 = vmatprep.subr.mxu0 0.0
  %1441 = vmatpush1.msra.mxu0 0.0
  %1442 = vmatprep.subr.mxu0 0.0
  %1443 = vmatpush1.msra.mxu0 0.0
  %1444 = vmatprep.subr.mxu0 0.0
  %1445 = vmatpush1.msra.mxu0 0.0
  %1446 = vmatprep.subr.mxu0 0.0
  %1447 = vmatpush1.msra.mxu0 0.0
  %1448 = vmatprep.subr.mxu0 0.0
  %1449 = vmatpush1.msra.mxu0 0.0
  %1450 = vmatprep.subr.mxu0 0.0
  %1451 = vmatpush1.msra.mxu0 0.0
  %1452 = vmatprep.subr.mxu0 0.0
  %1453 = vmatpush1.msra.mxu0 0.0
  %1454 = vmatprep.mubr.f32.mxu0 0.0
  %1455 = vmatmul.mubr.f32.gmra.mrb[0].mxu0 %v1244
  %v1456 = vpop.f32.mrb[0].mxu0
  %v1457 = vadd.f32 %v105, %v1456
  %v1458 = vpop.f32.mrb[0].mxu0
  %1459 = vdwg.mxu0
  %v1460 = vadd.f32 %v1318, %v1386
  %v1461 = vxor.u32 %v1460, 2147483648
  %v1462 = vmul.f32 %v1461, 1.442695
  %v1463 = vpow.pop %v1462
  %v1464 = vadd.f32 %v1463, 1.0
  %v1465 = vrcp.pop %v1464
  %v1466 = vmul.f32 1.0, %v1465
  %v1468 = vrot.slane %v1318, 2
  %v1470 = vadd.f32 %v1468, %v1388
  %v1471 = vxor.u32 %v1470, 2147483648
  %v1472 = vmul.f32 %v1471, 1.442695
  %v1473 = vpow.pop %v1472
  %v1474 = vadd.f32 %v1473, 1.0
  %v1475 = vrcp.pop %v1474
  %v1476 = vmul.f32 1.0, %v1475
  %v1477 = vmul.f32 %v1466, %v1457
  %v1478 = vrot.slane %v1318, 4
  %v1480 = vadd.f32 %v1478, %v1477
  %v1481 = vtanh.pop %v1480
  %v1482 = vsub.f32 1.0, %v1476
  %v1483 = vmul.f32 %v1482, %v1481
  %v1484 = vmul.f32 %v1476, %v1244
  %v1485 = vadd.f32 %v1483, %v1484
  %1486 = vmatprep.subr.mxu0 0.0
  %1487 = vmatpush1.msra.mxu0 %v74
  %1488 = vmatprep.subr.mxu0 0.0
  %1489 = vmatpush1.msra.mxu0 %v75
  %1490 = vmatprep.subr.mxu0 0.0
  %1491 = vmatpush1.msra.mxu0 %v76
  %1492 = vmatprep.subr.mxu0 0.0
  %1493 = vmatpush1.msra.mxu0 %v77
  %1494 = vmatprep.subr.mxu0 0.0
  %1495 = vmatpush1.msra.mxu0 %v78
  %1496 = vmatprep.subr.mxu0 0.0
  %1497 = vmatpush1.msra.mxu0 %v79
  %1498 = vmatprep.subr.mxu0 0.0
  %1499 = vmatpush1.msra.mxu0 %v80
  %1500 = vmatprep.subr.mxu0 0.0
  %1501 = vmatpush1.msra.mxu0 %v81
  %1502 = vmatprep.subr.mxu0 0.0
  %1503 = vmatpush1.msra.mxu0 %v82
  %1504 = vmatprep.subr.mxu0 0.0
  %1505 = vmatpush1.msra.mxu0 %v83
  %1506 = vmatprep.subr.mxu0 0.0
  %1507 = vmatpush1.msra.mxu0 %v84
  %1508 = vmatprep.subr.mxu0 0.0
  %1509 = vmatpush1.msra.mxu0 %v85
  %1510 = vmatprep.subr.mxu0 0.0
  %1511 = vmatpush1.msra.mxu0 %v86
  %1512 = vmatprep.subr.mxu0 0.0
  %1513 = vmatpush1.msra.mxu0 %v87
  %1514 = vmatprep.subr.mxu0 0.0
  %1515 = vmatpush1.msra.mxu0 %v88
  %1516 = vmatprep.subr.mxu0 0.0
  %1517 = vmatpush1.msra.mxu0 %v89
  %1518 = vmatprep.subr.mxu0 0.0
  %1519 = vmatpush1.msra.mxu0 0.0
  %1520 = vmatprep.subr.mxu0 0.0
  %1521 = vmatpush1.msra.mxu0 0.0
  %1522 = vmatprep.subr.mxu0 0.0
  %1523 = vmatpush1.msra.mxu0 0.0
  %1524 = vmatprep.subr.mxu0 0.0
  %1525 = vmatpush1.msra.mxu0 0.0
  %1526 = vmatprep.subr.mxu0 0.0
  %1527 = vmatpush1.msra.mxu0 0.0
  %1528 = vmatprep.subr.mxu0 0.0
  %1529 = vmatpush1.msra.mxu0 0.0
  %1530 = vmatprep.subr.mxu0 0.0
  %1531 = vmatpush1.msra.mxu0 0.0
  %1532 = vmatprep.subr.mxu0 0.0
  %1533 = vmatpush1.msra.mxu0 0.0
  %1534 = vmatprep.subr.mxu0 0.0
  %1535 = vmatpush1.msra.mxu0 0.0
  %1536 = vmatprep.subr.mxu0 0.0
  %1537 = vmatpush1.msra.mxu0 0.0
  %1538 = vmatprep.subr.mxu0 0.0
  %1539 = vmatpush1.msra.mxu0 0.0
  %1540 = vmatprep.subr.mxu0 0.0
  %1541 = vmatpush1.msra.mxu0 0.0
  %1542 = vmatprep.subr.mxu0 0.0
  %1543 = vmatpush1.msra.mxu0 0.0
  %1544 = vmatprep.subr.mxu0 0.0
  %1545 = vmatpush1.msra.mxu0 0.0
  %1546 = vmatprep.subr.mxu0 0.0
  %1547 = vmatpush1.msra.mxu0 0.0
  %1548 = vmatprep.subr.mxu0 0.0
  %1549 = vmatpush1.msra.mxu0 0.0
  %1550 = vmatprep.mubr.f32.mxu0 0.0
  %1551 = vmatmul.mubr.f32.gmra.mrb[0].mxu0 %v1485
  %v1552 = vpop.f32.mrb[0].mxu0
  %v1553 = vadd.f32 %v280, %v1552
  %v1554 = vpop.f32.mrb[0].mxu0
  %1555 = vdwg.mxu0
  %s1556 = scalar_lea.vmem %s5, 10
  %1557 = vst [vmem:[%s1556] sm:$0x3] %v1553
  %s1558 = scalar_lea.vmem %s0, 36
  %v1559 = vld [vmem:[%s1558] sm:$0x3f]
  %1560 = vmatprep.subr.mxu0 %v26
  %1561 = vmatpush1.msra.mxu0 %v25
  %1562 = vmatprep.subr.mxu0 %v29
  %1563 = vmatpush1.msra.mxu0 %v28
  %1564 = vmatprep.subr.mxu0 %v32
  %1565 = vmatpush1.msra.mxu0 %v31
  %1566 = vmatprep.subr.mxu0 %v35
  %1567 = vmatpush1.msra.mxu0 %v34
  %1568 = vmatprep.subr.mxu0 %v38
  %1569 = vmatpush1.msra.mxu0 %v37
  %1570 = vmatprep.subr.mxu0 %v41
  %1571 = vmatpush1.msra.mxu0 %v40
  %1572 = vmatprep.subr.mxu0 %v44
  %1573 = vmatpush1.msra.mxu0 %v43
  %1574 = vmatprep.subr.mxu0 %v47
  %1575 = vmatpush1.msra.mxu0 %v46
  %1576 = vmatprep.subr.mxu0 %v50
  %1577 = vmatpush1.msra.mxu0 %v49
  %1578 = vmatprep.subr.mxu0 %v53
  %1579 = vmatpush1.msra.mxu0 %v52
  %1580 = vmatprep.subr.mxu0 %v56
  %1581 = vmatpush1.msra.mxu0 %v55
  %1582 = vmatprep.subr.mxu0 %v59
  %1583 = vmatpush1.msra.mxu0 %v58
  %1584 = vmatprep.subr.mxu0 %v62
  %1585 = vmatpush1.msra.mxu0 %v61
  %1586 = vmatprep.subr.mxu0 %v65
  %1587 = vmatpush1.msra.mxu0 %v64
  %1588 = vmatprep.subr.mxu0 %v68
  %1589 = vmatpush1.msra.mxu0 %v67
  %1590 = vmatprep.subr.mxu0 %v71
  %1591 = vmatpush1.msra.mxu0 %v70
  %1592 = vmatprep.subr.mxu0 0.0
  %1593 = vmatpush1.msra.mxu0 0.0
  %1594 = vmatprep.subr.mxu0 0.0
  %1595 = vmatpush1.msra.mxu0 0.0
  %1596 = vmatprep.subr.mxu0 0.0
  %1597 = vmatpush1.msra.mxu0 0.0
  %1598 = vmatprep.subr.mxu0 0.0
  %1599 = vmatpush1.msra.mxu0 0.0
  %1600 = vmatprep.subr.mxu0 0.0
  %1601 = vmatpush1.msra.mxu0 0.0
  %1602 = vmatprep.subr.mxu0 0.0
  %1603 = vmatpush1.msra.mxu0 0.0
  %1604 = vmatprep.subr.mxu0 0.0
  %1605 = vmatpush1.msra.mxu0 0.0
  %1606 = vmatprep.subr.mxu0 0.0
  %1607 = vmatpush1.msra.mxu0 0.0
  %1608 = vmatprep.subr.mxu0 0.0
  %1609 = vmatpush1.msra.mxu0 0.0
  %1610 = vmatprep.subr.mxu0 0.0
  %1611 = vmatpush1.msra.mxu0 0.0
  %1612 = vmatprep.subr.mxu0 0.0
  %1613 = vmatpush1.msra.mxu0 0.0
  %1614 = vmatprep.subr.mxu0 0.0
  %1615 = vmatpush1.msra.mxu0 0.0
  %1616 = vmatprep.subr.mxu0 0.0
  %1617 = vmatpush1.msra.mxu0 0.0
  %1618 = vmatprep.subr.mxu0 0.0
  %1619 = vmatpush1.msra.mxu0 0.0
  %1620 = vmatprep.subr.mxu0 0.0
  %1621 = vmatpush1.msra.mxu0 0.0
  %1622 = vmatprep.subr.mxu0 0.0
  %1623 = vmatpush1.msra.mxu0 0.0
  %1624 = vmatprep.mubr.f32.mxu0 0.0
  %1625 = vmatmul.mubr.f32.gmra.mrb[0].mxu0 %v1485
  %v1626 = vpop.f32.mrb[0].mxu0
  %v1627 = vadd.f32 %v97, %v1626
  %v1628 = vpop.f32.mrb[0].mxu0
  %v1629 = vadd.f32 %v101, %v1628
  %1630 = vdwg.mxu0
  %1631 = vmatprep.subr.mxu0 0.0
  %1632 = vmatpush1.msra.mxu0 %v27
  %1633 = vmatprep.subr.mxu0 0.0
  %1634 = vmatpush1.msra.mxu0 %v30
  %1635 = vmatprep.subr.mxu0 0.0
  %1636 = vmatpush1.msra.mxu0 %v33
  %1637 = vmatprep.subr.mxu0 0.0
  %1638 = vmatpush1.msra.mxu0 %v36
  %1639 = vmatprep.subr.mxu0 0.0
  %1640 = vmatpush1.msra.mxu0 %v39
  %1641 = vmatprep.subr.mxu0 0.0
  %1642 = vmatpush1.msra.mxu0 %v42
  %1643 = vmatprep.subr.mxu0 0.0
  %1644 = vmatpush1.msra.mxu0 %v45
  %1645 = vmatprep.subr.mxu0 0.0
  %1646 = vmatpush1.msra.mxu0 %v48
  %1647 = vmatprep.subr.mxu0 0.0
  %1648 = vmatpush1.msra.mxu0 %v51
  %1649 = vmatprep.subr.mxu0 0.0
  %1650 = vmatpush1.msra.mxu0 %v54
  %1651 = vmatprep.subr.mxu0 0.0
  %1652 = vmatpush1.msra.mxu0 %v57
  %1653 = vmatprep.subr.mxu0 0.0
  %1654 = vmatpush1.msra.mxu0 %v60
  %1655 = vmatprep.subr.mxu0 0.0
  %1656 = vmatpush1.msra.mxu0 %v63
  %1657 = vmatprep.subr.mxu0 0.0
  %1658 = vmatpush1.msra.mxu0 %v66
  %1659 = vmatprep.subr.mxu0 0.0
  %1660 = vmatpush1.msra.mxu0 %v69
  %1661 = vmatprep.subr.mxu0 0.0
  %1662 = vmatpush1.msra.mxu0 %v72
  %1663 = vmatprep.subr.mxu0 0.0
  %1664 = vmatpush1.msra.mxu0 0.0
  %1665 = vmatprep.subr.mxu0 0.0
  %1666 = vmatpush1.msra.mxu0 0.0
  %1667 = vmatprep.subr.mxu0 0.0
  %1668 = vmatpush1.msra.mxu0 0.0
  %1669 = vmatprep.subr.mxu0 0.0
  %1670 = vmatpush1.msra.mxu0 0.0
  %1671 = vmatprep.subr.mxu0 0.0
  %1672 = vmatpush1.msra.mxu0 0.0
  %1673 = vmatprep.subr.mxu0 0.0
  %1674 = vmatpush1.msra.mxu0 0.0
  %1675 = vmatprep.subr.mxu0 0.0
  %1676 = vmatpush1.msra.mxu0 0.0
  %1677 = vmatprep.subr.mxu0 0.0
  %1678 = vmatpush1.msra.mxu0 0.0
  %1679 = vmatprep.subr.mxu0 0.0
  %1680 = vmatpush1.msra.mxu0 0.0
  %1681 = vmatprep.subr.mxu0 0.0
  %1682 = vmatpush1.msra.mxu0 0.0
  %1683 = vmatprep.subr.mxu0 0.0
  %1684 = vmatpush1.msra.mxu0 0.0
  %1685 = vmatprep.subr.mxu0 0.0
  %1686 = vmatpush1.msra.mxu0 0.0
  %1687 = vmatprep.subr.mxu0 0.0
  %1688 = vmatpush1.msra.mxu0 0.0
  %1689 = vmatprep.subr.mxu0 0.0
  %1690 = vmatpush1.msra.mxu0 0.0
  %1691 = vmatprep.subr.mxu0 0.0
  %1692 = vmatpush1.msra.mxu0 0.0
  %1693 = vmatprep.subr.mxu0 0.0
  %1694 = vmatpush1.msra.mxu0 0.0
  %1695 = vmatprep.mubr.f32.mxu0 0.0
  %1696 = vmatmul.mubr.f32.gmra.mrb[0].mxu0 %v1485
  %v1697 = vpop.f32.mrb[0].mxu0
  %v1698 = vadd.f32 %v105, %v1697
  %v1699 = vpop.f32.mrb[0].mxu0
  %1700 = vdwg.mxu0
  %v1701 = vadd.f32 %v1559, %v1627
  %v1702 = vxor.u32 %v1701, 2147483648
  %v1703 = vmul.f32 %v1702, 1.442695
  %v1704 = vpow.pop %v1703
  %v1705 = vadd.f32 %v1704, 1.0
  %v1706 = vrcp.pop %v1705
  %v1707 = vmul.f32 1.0, %v1706
  %v1709 = vrot.slane %v1559, 2
  %v1711 = vadd.f32 %v1709, %v1629
  %v1712 = vxor.u32 %v1711, 2147483648
  %v1713 = vmul.f32 %v1712, 1.442695
  %v1714 = vpow.pop %v1713
  %v1715 = vadd.f32 %v1714, 1.0
  %v1716 = vrcp.pop %v1715
  %v1717 = vmul.f32 1.0, %v1716
  %v1718 = vmul.f32 %v1707, %v1698
  %v1719 = vrot.slane %v1559, 4
  %v1721 = vadd.f32 %v1719, %v1718
  %v1722 = vtanh.pop %v1721
  %v1723 = vsub.f32 1.0, %v1717
  %v1724 = vmul.f32 %v1723, %v1722
  %v1725 = vmul.f32 %v1717, %v1485
  %v1726 = vadd.f32 %v1724, %v1725
  %1727 = vmatprep.subr.mxu0 0.0
  %1728 = vmatpush1.msra.mxu0 %v74
  %1729 = vmatprep.subr.mxu0 0.0
  %1730 = vmatpush1.msra.mxu0 %v75
  %1731 = vmatprep.subr.mxu0 0.0
  %1732 = vmatpush1.msra.mxu0 %v76
  %1733 = vmatprep.subr.mxu0 0.0
  %1734 = vmatpush1.msra.mxu0 %v77
  %1735 = vmatprep.subr.mxu0 0.0
  %1736 = vmatpush1.msra.mxu0 %v78
  %1737 = vmatprep.subr.mxu0 0.0
  %1738 = vmatpush1.msra.mxu0 %v79
  %1739 = vmatprep.subr.mxu0 0.0
  %1740 = vmatpush1.msra.mxu0 %v80
  %1741 = vmatprep.subr.mxu0 0.0
  %1742 = vmatpush1.msra.mxu0 %v81
  %1743 = vmatprep.subr.mxu0 0.0
  %1744 = vmatpush1.msra.mxu0 %v82
  %1745 = vmatprep.subr.mxu0 0.0
  %1746 = vmatpush1.msra.mxu0 %v83
  %1747 = vmatprep.subr.mxu0 0.0
  %1748 = vmatpush1.msra.mxu0 %v84
  %1749 = vmatprep.subr.mxu0 0.0
  %1750 = vmatpush1.msra.mxu0 %v85
  %1751 = vmatprep.subr.mxu0 0.0
  %1752 = vmatpush1.msra.mxu0 %v86
  %1753 = vmatprep.subr.mxu0 0.0
  %1754 = vmatpush1.msra.mxu0 %v87
  %1755 = vmatprep.subr.mxu0 0.0
  %1756 = vmatpush1.msra.mxu0 %v88
  %1757 = vmatprep.subr.mxu0 0.0
  %1758 = vmatpush1.msra.mxu0 %v89
  %1759 = vmatprep.subr.mxu0 0.0
  %1760 = vmatpush1.msra.mxu0 0.0
  %1761 = vmatprep.subr.mxu0 0.0
  %1762 = vmatpush1.msra.mxu0 0.0
  %1763 = vmatprep.subr.mxu0 0.0
  %1764 = vmatpush1.msra.mxu0 0.0
  %1765 = vmatprep.subr.mxu0 0.0
  %1766 = vmatpush1.msra.mxu0 0.0
  %1767 = vmatprep.subr.mxu0 0.0
  %1768 = vmatpush1.msra.mxu0 0.0
  %1769 = vmatprep.subr.mxu0 0.0
  %1770 = vmatpush1.msra.mxu0 0.0
  %1771 = vmatprep.subr.mxu0 0.0
  %1772 = vmatpush1.msra.mxu0 0.0
  %1773 = vmatprep.subr.mxu0 0.0
  %1774 = vmatpush1.msra.mxu0 0.0
  %1775 = vmatprep.subr.mxu0 0.0
  %1776 = vmatpush1.msra.mxu0 0.0
  %1777 = vmatprep.subr.mxu0 0.0
  %1778 = vmatpush1.msra.mxu0 0.0
  %1779 = vmatprep.subr.mxu0 0.0
  %1780 = vmatpush1.msra.mxu0 0.0
  %1781 = vmatprep.subr.mxu0 0.0
  %1782 = vmatpush1.msra.mxu0 0.0
  %1783 = vmatprep.subr.mxu0 0.0
  %1784 = vmatpush1.msra.mxu0 0.0
  %1785 = vmatprep.subr.mxu0 0.0
  %1786 = vmatpush1.msra.mxu0 0.0
  %1787 = vmatprep.subr.mxu0 0.0
  %1788 = vmatpush1.msra.mxu0 0.0
  %1789 = vmatprep.subr.mxu0 0.0
  %1790 = vmatpush1.msra.mxu0 0.0
  %1791 = vmatprep.mubr.f32.mxu0 0.0
  %1792 = vmatmul.mubr.f32.gmra.mrb[0].mxu0 %v1726
  %v1793 = vpop.f32.mrb[0].mxu0
  %v1794 = vadd.f32 %v280, %v1793
  %v1795 = vpop.f32.mrb[0].mxu0
  %1796 = vdwg.mxu0
  %s1797 = scalar_lea.vmem %s5, 12
  %1798 = vst [vmem:[%s1797] sm:$0x3] %v1794
  %s1799 = scalar_lea.vmem %s0, 42
  %v1800 = vld [vmem:[%s1799] sm:$0x3f]
  %1801 = vmatprep.subr.mxu0 %v26
  %1802 = vmatpush1.msra.mxu0 %v25
  %1803 = vmatprep.subr.mxu0 %v29
  %1804 = vmatpush1.msra.mxu0 %v28
  %1805 = vmatprep.subr.mxu0 %v32
  %1806 = vmatpush1.msra.mxu0 %v31
  %1807 = vmatprep.subr.mxu0 %v35
  %1808 = vmatpush1.msra.mxu0 %v34
  %1809 = vmatprep.subr.mxu0 %v38
  %1810 = vmatpush1.msra.mxu0 %v37
  %1811 = vmatprep.subr.mxu0 %v41
  %1812 = vmatpush1.msra.mxu0 %v40
  %1813 = vmatprep.subr.mxu0 %v44
  %1814 = vmatpush1.msra.mxu0 %v43
  %1815 = vmatprep.subr.mxu0 %v47
  %1816 = vmatpush1.msra.mxu0 %v46
  %1817 = vmatprep.subr.mxu0 %v50
  %1818 = vmatpush1.msra.mxu0 %v49
  %1819 = vmatprep.subr.mxu0 %v53
  %1820 = vmatpush1.msra.mxu0 %v52
  %1821 = vmatprep.subr.mxu0 %v56
  %1822 = vmatpush1.msra.mxu0 %v55
  %1823 = vmatprep.subr.mxu0 %v59
  %1824 = vmatpush1.msra.mxu0 %v58
  %1825 = vmatprep.subr.mxu0 %v62
  %1826 = vmatpush1.msra.mxu0 %v61
  %1827 = vmatprep.subr.mxu0 %v65
  %1828 = vmatpush1.msra.mxu0 %v64
  %1829 = vmatprep.subr.mxu0 %v68
  %1830 = vmatpush1.msra.mxu0 %v67
  %1831 = vmatprep.subr.mxu0 %v71
  %1832 = vmatpush1.msra.mxu0 %v70
  %1833 = vmatprep.subr.mxu0 0.0
  %1834 = vmatpush1.msra.mxu0 0.0
  %1835 = vmatprep.subr.mxu0 0.0
  %1836 = vmatpush1.msra.mxu0 0.0
  %1837 = vmatprep.subr.mxu0 0.0
  %1838 = vmatpush1.msra.mxu0 0.0
  %1839 = vmatprep.subr.mxu0 0.0
  %1840 = vmatpush1.msra.mxu0 0.0
  %1841 = vmatprep.subr.mxu0 0.0
  %1842 = vmatpush1.msra.mxu0 0.0
  %1843 = vmatprep.subr.mxu0 0.0
  %1844 = vmatpush1.msra.mxu0 0.0
  %1845 = vmatprep.subr.mxu0 0.0
  %1846 = vmatpush1.msra.mxu0 0.0
  %1847 = vmatprep.subr.mxu0 0.0
  %1848 = vmatpush1.msra.mxu0 0.0
  %1849 = vmatprep.subr.mxu0 0.0
  %1850 = vmatpush1.msra.mxu0 0.0
  %1851 = vmatprep.subr.mxu0 0.0
  %1852 = vmatpush1.msra.mxu0 0.0
  %1853 = vmatprep.subr.mxu0 0.0
  %1854 = vmatpush1.msra.mxu0 0.0
  %1855 = vmatprep.subr.mxu0 0.0
  %1856 = vmatpush1.msra.mxu0 0.0
  %1857 = vmatprep.subr.mxu0 0.0
  %1858 = vmatpush1.msra.mxu0 0.0
  %1859 = vmatprep.subr.mxu0 0.0
  %1860 = vmatpush1.msra.mxu0 0.0
  %1861 = vmatprep.subr.mxu0 0.0
  %1862 = vmatpush1.msra.mxu0 0.0
  %1863 = vmatprep.subr.mxu0 0.0
  %1864 = vmatpush1.msra.mxu0 0.0
  %1865 = vmatprep.mubr.f32.mxu0 0.0
  %1866 = vmatmul.mubr.f32.gmra.mrb[0].mxu0 %v1726
  %v1867 = vpop.f32.mrb[0].mxu0
  %v1868 = vadd.f32 %v97, %v1867
  %v1869 = vpop.f32.mrb[0].mxu0
  %v1870 = vadd.f32 %v101, %v1869
  %1871 = vdwg.mxu0
  %1872 = vmatprep.subr.mxu0 0.0
  %1873 = vmatpush1.msra.mxu0 %v27
  %1874 = vmatprep.subr.mxu0 0.0
  %1875 = vmatpush1.msra.mxu0 %v30
  %1876 = vmatprep.subr.mxu0 0.0
  %1877 = vmatpush1.msra.mxu0 %v33
  %1878 = vmatprep.subr.mxu0 0.0
  %1879 = vmatpush1.msra.mxu0 %v36
  %1880 = vmatprep.subr.mxu0 0.0
  %1881 = vmatpush1.msra.mxu0 %v39
  %1882 = vmatprep.subr.mxu0 0.0
  %1883 = vmatpush1.msra.mxu0 %v42
  %1884 = vmatprep.subr.mxu0 0.0
  %1885 = vmatpush1.msra.mxu0 %v45
  %1886 = vmatprep.subr.mxu0 0.0
  %1887 = vmatpush1.msra.mxu0 %v48
  %1888 = vmatprep.subr.mxu0 0.0
  %1889 = vmatpush1.msra.mxu0 %v51
  %1890 = vmatprep.subr.mxu0 0.0
  %1891 = vmatpush1.msra.mxu0 %v54
  %1892 = vmatprep.subr.mxu0 0.0
  %1893 = vmatpush1.msra.mxu0 %v57
  %1894 = vmatprep.subr.mxu0 0.0
  %1895 = vmatpush1.msra.mxu0 %v60
  %1896 = vmatprep.subr.mxu0 0.0
  %1897 = vmatpush1.msra.mxu0 %v63
  %1898 = vmatprep.subr.mxu0 0.0
  %1899 = vmatpush1.msra.mxu0 %v66
  %1900 = vmatprep.subr.mxu0 0.0
  %1901 = vmatpush1.msra.mxu0 %v69
  %1902 = vmatprep.subr.mxu0 0.0
  %1903 = vmatpush1.msra.mxu0 %v72
  %1904 = vmatprep.subr.mxu0 0.0
  %1905 = vmatpush1.msra.mxu0 0.0
  %1906 = vmatprep.subr.mxu0 0.0
  %1907 = vmatpush1.msra.mxu0 0.0
  %1908 = vmatprep.subr.mxu0 0.0
  %1909 = vmatpush1.msra.mxu0 0.0
  %1910 = vmatprep.subr.mxu0 0.0
  %1911 = vmatpush1.msra.mxu0 0.0
  %1912 = vmatprep.subr.mxu0 0.0
  %1913 = vmatpush1.msra.mxu0 0.0
  %1914 = vmatprep.subr.mxu0 0.0
  %1915 = vmatpush1.msra.mxu0 0.0
  %1916 = vmatprep.subr.mxu0 0.0
  %1917 = vmatpush1.msra.mxu0 0.0
  %1918 = vmatprep.subr.mxu0 0.0
  %1919 = vmatpush1.msra.mxu0 0.0
  %1920 = vmatprep.subr.mxu0 0.0
  %1921 = vmatpush1.msra.mxu0 0.0
  %1922 = vmatprep.subr.mxu0 0.0
  %1923 = vmatpush1.msra.mxu0 0.0
  %1924 = vmatprep.subr.mxu0 0.0
  %1925 = vmatpush1.msra.mxu0 0.0
  %1926 = vmatprep.subr.mxu0 0.0
  %1927 = vmatpush1.msra.mxu0 0.0
  %1928 = vmatprep.subr.mxu0 0.0
  %1929 = vmatpush1.msra.mxu0 0.0
  %1930 = vmatprep.subr.mxu0 0.0
  %1931 = vmatpush1.msra.mxu0 0.0
  %1932 = vmatprep.subr.mxu0 0.0
  %1933 = vmatpush1.msra.mxu0 0.0
  %1934 = vmatprep.subr.mxu0 0.0
  %1935 = vmatpush1.msra.mxu0 0.0
  %1936 = vmatprep.mubr.f32.mxu0 0.0
  %1937 = vmatmul.mubr.f32.gmra.mrb[0].mxu0 %v1726
  %v1938 = vpop.f32.mrb[0].mxu0
  %v1939 = vadd.f32 %v105, %v1938
  %v1940 = vpop.f32.mrb[0].mxu0
  %1941 = vdwg.mxu0
  %v1942 = vadd.f32 %v1800, %v1868
  %v1943 = vxor.u32 %v1942, 2147483648
  %v1944 = vmul.f32 %v1943, 1.442695
  %v1945 = vpow.pop %v1944
  %v1946 = vadd.f32 %v1945, 1.0
  %v1947 = vrcp.pop %v1946
  %v1948 = vmul.f32 1.0, %v1947
  %v1950 = vrot.slane %v1800, 2
  %v1952 = vadd.f32 %v1950, %v1870
  %v1953 = vxor.u32 %v1952, 2147483648
  %v1954 = vmul.f32 %v1953, 1.442695
  %v1955 = vpow.pop %v1954
  %v1956 = vadd.f32 %v1955, 1.0
  %v1957 = vrcp.pop %v1956
  %v1958 = vmul.f32 1.0, %v1957
  %v1959 = vmul.f32 %v1948, %v1939
  %v1960 = vrot.slane %v1800, 4
  %v1962 = vadd.f32 %v1960, %v1959
  %v1963 = vtanh.pop %v1962
  %v1964 = vsub.f32 1.0, %v1958
  %v1965 = vmul.f32 %v1964, %v1963
  %v1966 = vmul.f32 %v1958, %v1726
  %v1967 = vadd.f32 %v1965, %v1966
  %1968 = vmatprep.subr.mxu0 0.0
  %1969 = vmatpush1.msra.mxu0 %v74
  %1970 = vmatprep.subr.mxu0 0.0
  %1971 = vmatpush1.msra.mxu0 %v75
  %1972 = vmatprep.subr.mxu0 0.0
  %1973 = vmatpush1.msra.mxu0 %v76
  %1974 = vmatprep.subr.mxu0 0.0
  %1975 = vmatpush1.msra.mxu0 %v77
  %1976 = vmatprep.subr.mxu0 0.0
  %1977 = vmatpush1.msra.mxu0 %v78
  %1978 = vmatprep.subr.mxu0 0.0
  %1979 = vmatpush1.msra.mxu0 %v79
  %1980 = vmatprep.subr.mxu0 0.0
  %1981 = vmatpush1.msra.mxu0 %v80
  %1982 = vmatprep.subr.mxu0 0.0
  %1983 = vmatpush1.msra.mxu0 %v81
  %1984 = vmatprep.subr.mxu0 0.0
  %1985 = vmatpush1.msra.mxu0 %v82
  %1986 = vmatprep.subr.mxu0 0.0
  %1987 = vmatpush1.msra.mxu0 %v83
  %1988 = vmatprep.subr.mxu0 0.0
  %1989 = vmatpush1.msra.mxu0 %v84
  %1990 = vmatprep.subr.mxu0 0.0
  %1991 = vmatpush1.msra.mxu0 %v85
  %1992 = vmatprep.subr.mxu0 0.0
  %1993 = vmatpush1.msra.mxu0 %v86
  %1994 = vmatprep.subr.mxu0 0.0
  %1995 = vmatpush1.msra.mxu0 %v87
  %1996 = vmatprep.subr.mxu0 0.0
  %1997 = vmatpush1.msra.mxu0 %v88
  %1998 = vmatprep.subr.mxu0 0.0
  %1999 = vmatpush1.msra.mxu0 %v89
  %2000 = vmatprep.subr.mxu0 0.0
  %2001 = vmatpush1.msra.mxu0 0.0
  %2002 = vmatprep.subr.mxu0 0.0
  %2003 = vmatpush1.msra.mxu0 0.0
  %2004 = vmatprep.subr.mxu0 0.0
  %2005 = vmatpush1.msra.mxu0 0.0
  %2006 = vmatprep.subr.mxu0 0.0
  %2007 = vmatpush1.msra.mxu0 0.0
  %2008 = vmatprep.subr.mxu0 0.0
  %2009 = vmatpush1.msra.mxu0 0.0
  %2010 = vmatprep.subr.mxu0 0.0
  %2011 = vmatpush1.msra.mxu0 0.0
  %2012 = vmatprep.subr.mxu0 0.0
  %2013 = vmatpush1.msra.mxu0 0.0
  %2014 = vmatprep.subr.mxu0 0.0
  %2015 = vmatpush1.msra.mxu0 0.0
  %2016 = vmatprep.subr.mxu0 0.0
  %2017 = vmatpush1.msra.mxu0 0.0
  %2018 = vmatprep.subr.mxu0 0.0
  %2019 = vmatpush1.msra.mxu0 0.0
  %2020 = vmatprep.subr.mxu0 0.0
  %2021 = vmatpush1.msra.mxu0 0.0
  %2022 = vmatprep.subr.mxu0 0.0
  %2023 = vmatpush1.msra.mxu0 0.0
  %2024 = vmatprep.subr.mxu0 0.0
  %2025 = vmatpush1.msra.mxu0 0.0
  %2026 = vmatprep.subr.mxu0 0.0
  %2027 = vmatpush1.msra.mxu0 0.0
  %2028 = vmatprep.subr.mxu0 0.0
  %2029 = vmatpush1.msra.mxu0 0.0
  %2030 = vmatprep.subr.mxu0 0.0
  %2031 = vmatpush1.msra.mxu0 0.0
  %2032 = vmatprep.mubr.f32.mxu0 0.0
  %2033 = vmatmul.mubr.f32.gmra.mrb[0].mxu0 %v1967
  %v2034 = vpop.f32.mrb[0].mxu0
  %v2035 = vadd.f32 %v280, %v2034
  %v2036 = vpop.f32.mrb[0].mxu0
  %2037 = vdwg.mxu0
  %s2038 = scalar_lea.vmem %s5, 14
  %2039 = vst [vmem:[%s2038] sm:$0x3] %v2035
  %2040 = vst [vmem:[#allocation2] sm:$0x3] %v1967
  // Predicated region
  $region26: #{gru_forward.1} parent=0 // pred_check
    _
  $region27: #{gru_forward.1} parent=0 // pred_check_branch
    %2042 = sbr.rel (0) target = $region29
  $region28: #{gru_forward.1} parent=0 // pred_region
    _
  $region29: #{gru_forward.1} parent=0 // pred_fallthru
    _
  // Predicated region
  $region30: #{gru_forward.1} parent=0 // pred_check
    _
  $region31: #{gru_forward.1} parent=0 // pred_check_branch
    %2044 = sbr.rel (0) target = $region33
  $region32: #{gru_forward.1} parent=0 // pred_region
    _
  $region33: #{gru_forward.1} parent=0 // pred_fallthru
    _

</llo_original>
